<compile_context>
chip_gen: v7x
topology: tpu7x:2x2x1
jax: 0.10.0
libtpu: 0.0.40
codegen_flags: <defaults>
</compile_context>

<pallas_src>
import functools

import jax
import jax.numpy as jnp
from jax import lax
from jax.experimental import pallas as pl
from jax.experimental.pallas import tpu as pltpu

EMBED_DIM = 32
HIDDEN_DIM = 16
ENCODE_DIM = 32
HEADS0 = 3
HEADS1 = 1
RATIO0 = 0.7
RATIO1 = 0.5
NEG_SLOPE = 0.2          # GATConv LeakyReLU negative slope (PyG default)
BN_EPS = 1e-5            # BatchNorm eps (torch default)
NEG_INF = -1e30


def _vmem_specs(n):
    return [pl.BlockSpec(memory_space=pltpu.MemorySpace.VMEM) for _ in range(n)]


# --------------------------------------------------------------------------
# One fused kernel for the whole StatementEncoder forward.
# adj[target, source] is a {0,1} mask WITHOUT self loops (added in-kernel).
# onehot[i, g] = 1 iff node i belongs to graph g; samegraph[i, j] = 1 iff
# nodes i and j belong to the same graph (both static per input).
# --------------------------------------------------------------------------
def statement_encoder_kernel(
        x_ref, adj_ref, onehot_ref, samegraph_ref,
        w0_ref, adst0_ref, asrc0_ref, bias0_ref, gamma0_ref, beta0_ref, poolw0_ref,
        w1_ref, adst1_ref, asrc1_ref, bias1_ref, gamma1_ref, beta1_ref, poolw1_ref,
        mw1_ref, mb1_ref, mw2_ref, mb2_ref,
        out_ref, *, heads0, oph0, heads1, oph1, num_graphs):
    n = x_ref.shape[0]

    # Hoisted constants reused by every stage.
    row_i = lax.broadcasted_iota(jnp.int32, (n, n), 0)   # target / row index i
    col_j = lax.broadcasted_iota(jnp.int32, (n, n), 1)   # source / col index j
    eye = row_i == col_j

    def row_of(v_col):
        # [N,1] column -> [1,N] row without an in-kernel transpose/relayout:
        # scatter onto the diagonal, reduce over the sublane axis (XLU).
        return jnp.sum(jnp.where(eye, v_col, 0.0), axis=0, keepdims=True)

    def mask_bias_of(edge_f32):
        # Additive softmax mask; GATConv adds self loops for every node.
        return jnp.where((edge_f32 > 0.0) | eye, 0.0, NEG_INF)

    # ---- GATConv (multi-head, concat) + Tanh --------------------------------
    def gat_tanh(h, mbias, w, adst, asrc, bias, heads, oph):
        xp = jnp.dot(h, w, preferred_element_type=jnp.float32)          # [N, heads*oph]
        e_dst = jnp.dot(xp, adst, preferred_element_type=jnp.float32)   # [N, heads]
        e_src = jnp.dot(xp, asrc, preferred_element_type=jnp.float32)   # [N, heads]
        outs = []
        for hh in range(heads):                                         # static unroll (heads<=3)
            logit = e_dst[:, hh:hh + 1] + row_of(e_src[:, hh:hh + 1])   # [N, N] edge j->i
            logit = jnp.where(logit > 0, logit, NEG_SLOPE * logit)      # LeakyReLU(0.2)
            logit = logit + mbias                                       # hoisted adjacency mask
            m = jnp.max(logit, axis=1, keepdims=True)
            p = jnp.exp(logit - m)
            denom = jnp.sum(p, axis=1, keepdims=True)
            alpha = p * pl.reciprocal(denom, approx=True)               # EUP reciprocal
            outs.append(jnp.dot(alpha, xp[:, hh * oph:(hh + 1) * oph],
                                preferred_element_type=jnp.float32))
        out = outs[0] if heads == 1 else jnp.concatenate(outs, axis=1)
        return jnp.tanh(out + bias)

    # ---- BatchNorm over valid nodes (batch statistics, biased variance) -----
    def batchnorm(h, valid_col, gamma, beta):
        cnt = jnp.maximum(jnp.sum(valid_col, axis=0, keepdims=True), 1.0)   # [1,1], NaN guard
        inv_cnt = pl.reciprocal(cnt, approx=True)
        mean = jnp.sum(h * valid_col, axis=0, keepdims=True) * inv_cnt      # [1,F]
        diff = (h - mean) * valid_col
        var = jnp.sum(diff * diff, axis=0, keepdims=True) * inv_cnt
        return gamma * (h - mean) * lax.rsqrt(var + BN_EPS) + beta

    # ---- TopKPooling (score, per-graph top-k selection, filter_adj) ---------
    def topk_pool(h, edge_f32, valid_col, valid_row, w_col, ratio):
        inv_norm = lax.rsqrt(jnp.sum(w_col * w_col, axis=0, keepdims=True))       # [1,1]
        score_col = jnp.tanh(
            jnp.dot(h, w_col, preferred_element_type=jnp.float32) * inv_norm)     # [N,1]
        score_row = row_of(score_col)                                             # [1,N]

        samegraph = samegraph_ref[...]
        # valid-node count of my own graph (same value for every node of a graph)
        cnt_node = jnp.sum(jnp.where((samegraph > 0) & (valid_row > 0), 1.0, 0.0),
                           axis=1, keepdims=True)                                 # [N,1]
        k_node = jnp.ceil(ratio * cnt_node)                                       # ceil(ratio*n_g)

        same_valid = (samegraph > 0) & (valid_col > 0) & (valid_row > 0)
        better = (score_row > score_col) | ((score_row == score_col) & (col_j < row_i))
        rank = jnp.sum(jnp.where(same_valid & better, 1.0, 0.0), axis=1, keepdims=True)
        keep_col = jnp.where((valid_col > 0) & (rank < k_node), 1.0, 0.0)          # [N,1]
        keep_row = row_of(keep_col)                                                # [1,N]

        h_new = h * (score_col * keep_col)            # x[perm] * tanh(score[perm]); dropped -> 0
        edge_new = edge_f32 * keep_col * keep_row     # filter_adj
        return h_new, edge_new, keep_col, keep_row

    # ------------------------------- forward ---------------------------------
    edge0 = adj_ref[...]                              # [N,N] {0,1}, no self loops
    valid0_col = jnp.ones((n, 1), jnp.float32)
    valid0_row = jnp.ones((1, n), jnp.float32)

    # layer_0: GATConv(32 -> 16, heads=3) -> Tanh -> BatchNorm(48)
    h = gat_tanh(x_ref[...], mask_bias_of(edge0), w0_ref[...], adst0_ref[...],
                 asrc0_ref[...], bias0_ref[...], heads0, oph0)
    h = batchnorm(h, valid0_col, gamma0_ref[...], beta0_ref[...])

    # pooling_0 (ratio 0.7) + ReLU
    h, edge1, valid1_col, valid1_row = topk_pool(
        h, edge0, valid0_col, valid0_row, poolw0_ref[...], RATIO0)
    h = jnp.maximum(h, 0.0)

    # layer_1: GATConv(48 -> 16, heads=1) -> Tanh -> BatchNorm(16)
    h = gat_tanh(h, mask_bias_of(edge1), w1_ref[...], adst1_ref[...],
                 asrc1_ref[...], bias1_ref[...], heads1, oph1)
    h = batchnorm(h, valid1_col, gamma1_ref[...], beta1_ref[...])

    # pooling_1 (ratio 0.5)
    h, _, valid2_col, _ = topk_pool(
        h, edge1, valid1_col, valid1_row, poolw1_ref[...], RATIO1)

    # global_max_pool (masked) -> ReLU -> MLP
    rows = []
    for g in range(num_graphs):
        m = onehot_ref[:, g:g + 1] * valid2_col                          # [N,1]
        rows.append(jnp.max(jnp.where(m > 0, h, NEG_INF), axis=0, keepdims=True))
    pooled = jnp.maximum(jnp.concatenate(rows, axis=0), 0.0)             # [G, 16]
    z = jnp.maximum(
        jnp.dot(pooled, mw1_ref[...], preferred_element_type=jnp.float32) + mb1_ref[...], 0.0)
    out_ref[...] = jnp.dot(z, mw2_ref[...], preferred_element_type=jnp.float32) + mb2_ref[...]


# --------------------------------------------------------------------------
# Wrapper: one jitted dispatch -> one pallas_call.
# --------------------------------------------------------------------------
@functools.partial(jax.jit, static_argnames=("num_graphs",))
def statement_encoder_forward(x, adj_bool, batch, params, num_graphs):
    adj_f = adj_bool.astype(jnp.float32)                                          # {0,1}
    onehot = (batch[:, None] == jnp.arange(num_graphs, dtype=batch.dtype)[None, :]
              ).astype(jnp.float32)                                               # [N, G]
    samegraph = (batch[:, None] == batch[None, :]).astype(jnp.float32)            # [N, N]

    kernel = functools.partial(
        statement_encoder_kernel,
        heads0=HEADS0, oph0=HIDDEN_DIM,
        heads1=HEADS1, oph1=HIDDEN_DIM,
        num_graphs=num_graphs)

    return pl.pallas_call(
        kernel,
        out_shape=jax.ShapeDtypeStruct((num_graphs, ENCODE_DIM), jnp.float32),
        in_specs=_vmem_specs(22),
        out_specs=pl.BlockSpec(memory_space=pltpu.MemorySpace.VMEM),
    )(x, adj_f, onehot, samegraph,
      params["gat0"]["w"], params["gat0"]["adst"], params["gat0"]["asrc"],
      params["gat0"]["bias"], params["bn0"]["gamma"], params["bn0"]["beta"],
      params["pool0_w"],
      params["gat1"]["w"], params["gat1"]["adst"], params["gat1"]["asrc"],
      params["gat1"]["bias"], params["bn1"]["gamma"], params["bn1"]["beta"],
      params["pool1_w"],
      params["mlp_w1"], params["mlp_b1"], params["mlp_w2"], params["mlp_b2"])


# --------------------------------------------------------------------------
# Deterministic parameter init
# --------------------------------------------------------------------------
def head_attn_matrix(a):
    # a: [heads, H]  ->  block matrix [heads*H, heads] so e = xp @ m gives per-head dots
    heads, hdim = a.shape
    m = jnp.zeros((heads * hdim, heads), jnp.float32)
    for h in range(heads):
        m = m.at[h * hdim:(h + 1) * hdim, h].set(a[h])
    return m


def init_params(key):
    ks = jax.random.split(key, 20)

    def nrm(k, shape, scale=0.1):
        return scale * jax.random.normal(k, shape, dtype=jnp.float32)

    f0 = HEADS0 * HIDDEN_DIM
    gat0 = dict(w=nrm(ks[0], (EMBED_DIM, f0)),
                adst=head_attn_matrix(nrm(ks[1], (HEADS0, HIDDEN_DIM))),
                asrc=head_attn_matrix(nrm(ks[2], (HEADS0, HIDDEN_DIM))),
                bias=nrm(ks[3], (1, f0)))
    bn0 = dict(gamma=1.0 + nrm(ks[4], (1, f0), 0.05), beta=nrm(ks[5], (1, f0), 0.05))
    pool0_w = nrm(ks[6], (f0, 1))

    gat1 = dict(w=nrm(ks[7], (f0, HIDDEN_DIM)),
                adst=head_attn_matrix(nrm(ks[8], (HEADS1, HIDDEN_DIM))),
                asrc=head_attn_matrix(nrm(ks[9], (HEADS1, HIDDEN_DIM))),
                bias=nrm(ks[10], (1, HIDDEN_DIM)))
    bn1 = dict(gamma=1.0 + nrm(ks[11], (1, HIDDEN_DIM), 0.05),
               beta=nrm(ks[12], (1, HIDDEN_DIM), 0.05))
    pool1_w = nrm(ks[13], (HIDDEN_DIM, 1))

    return dict(gat0=gat0, bn0=bn0, pool0_w=pool0_w,
                gat1=gat1, bn1=bn1, pool1_w=pool1_w,
                mlp_w1=nrm(ks[14], (HIDDEN_DIM, HIDDEN_DIM)),
                mlp_b1=nrm(ks[15], (1, HIDDEN_DIM)),
                mlp_w2=nrm(ks[16], (HIDDEN_DIM, ENCODE_DIM)),
                mlp_b2=nrm(ks[17], (1, ENCODE_DIM)))


if __name__ == "__main__":
    key = jax.random.PRNGKey(0)
    kp, kx = jax.random.split(key)
    params = init_params(kp)

    num_graphs, nodes_per_graph = 2, 8
    n_total = num_graphs * nodes_per_graph

    x = jax.random.normal(kx, (n_total, EMBED_DIM), dtype=jnp.float32)
    batch = jnp.repeat(jnp.arange(num_graphs, dtype=jnp.int32), nodes_per_graph)

    # bidirectional chain inside each graph; adj[target, source]
    adj = jnp.zeros((n_total, n_total), dtype=bool)
    for g in range(num_graphs):
        base = g * nodes_per_graph
        for i in range(nodes_per_graph - 1):
            adj = adj.at[base + i + 1, base + i].set(True)
            adj = adj.at[base + i, base + i + 1].set(True)

    out = statement_encoder_forward(x, adj, batch, params, num_graphs)
    out = jax.block_until_ready(out)
    assert out.shape == (num_graphs, ENCODE_DIM), out.shape
    assert bool(jnp.all(jnp.isfinite(out)))
    print("KERNEL_OK")
</pallas_src>

<mosaic_0001>
module attributes {stable_mosaic.version = 11 : i64} {
  func.func @statement_encoder_kernel(%arg0: memref<16x32xf32, #tpu.memory_space<vmem>>, %arg1: memref<16x16xf32, #tpu.memory_space<vmem>>, %arg2: memref<16x2xf32, #tpu.memory_space<vmem>>, %arg3: memref<16x16xf32, #tpu.memory_space<vmem>>, %arg4: memref<32x48xf32, #tpu.memory_space<vmem>>, %arg5: memref<48x3xf32, #tpu.memory_space<vmem>>, %arg6: memref<48x3xf32, #tpu.memory_space<vmem>>, %arg7: memref<1x48xf32, #tpu.memory_space<vmem>>, %arg8: memref<1x48xf32, #tpu.memory_space<vmem>>, %arg9: memref<1x48xf32, #tpu.memory_space<vmem>>, %arg10: memref<48x1xf32, #tpu.memory_space<vmem>>, %arg11: memref<48x16xf32, #tpu.memory_space<vmem>>, %arg12: memref<16x1xf32, #tpu.memory_space<vmem>>, %arg13: memref<16x1xf32, #tpu.memory_space<vmem>>, %arg14: memref<1x16xf32, #tpu.memory_space<vmem>>, %arg15: memref<1x16xf32, #tpu.memory_space<vmem>>, %arg16: memref<1x16xf32, #tpu.memory_space<vmem>>, %arg17: memref<16x1xf32, #tpu.memory_space<vmem>>, %arg18: memref<16x16xf32, #tpu.memory_space<vmem>>, %arg19: memref<1x16xf32, #tpu.memory_space<vmem>>, %arg20: memref<16x32xf32, #tpu.memory_space<vmem>>, %arg21: memref<1x32xf32, #tpu.memory_space<vmem>>, %arg22: memref<2x32xf32, #tpu.memory_space<vmem>>) attributes {dimension_semantics = [], scalar_prefetch = 0 : i64, scratch_operands = 0 : i64, tpu.core_type = #tpu.core_type<tc>} {
    %0 = tpu.iota {dimensions = array<i32: 0>} : vector<16x16xi32>
    %1 = tpu.iota {dimensions = array<i32: 1>} : vector<16x16xi32>
    %2 = arith.cmpi eq, %0, %1 : vector<16x16xi32>
    %c0 = arith.constant 0 : index
    %c0_0 = arith.constant 0 : index
    %3 = vector.load %arg1[%c0, %c0_0] : memref<16x16xf32, #tpu.memory_space<vmem>>, vector<16x16xf32>
    %cst = arith.constant 1.000000e+00 : f32
    %4 = vector.broadcast %cst : f32 to vector<16x1xf32>
    %cst_1 = arith.constant 1.000000e+00 : f32
    %5 = vector.broadcast %cst_1 : f32 to vector<1x16xf32>
    %c0_2 = arith.constant 0 : index
    %c0_3 = arith.constant 0 : index
    %6 = vector.load %arg0[%c0_2, %c0_3] : memref<16x32xf32, #tpu.memory_space<vmem>>, vector<16x32xf32>
    %cst_4 = arith.constant 0.000000e+00 : f32
    %7 = vector.broadcast %cst_4 : f32 to vector<16x16xf32>
    %8 = arith.cmpf ogt, %3, %7 : vector<16x16xf32>
    %9 = arith.ori %8, %2 : vector<16x16xi1>
    %cst_5 = arith.constant 0.000000e+00 : f32
    %cst_6 = arith.constant -1.000000e+30 : f32
    %10 = vector.broadcast %cst_5 : f32 to vector<16x16xf32>
    %11 = vector.broadcast %cst_6 : f32 to vector<16x16xf32>
    %12 = arith.select %9, %10, %11 : vector<16x16xi1>, vector<16x16xf32>
    %c0_7 = arith.constant 0 : index
    %c0_8 = arith.constant 0 : index
    %13 = vector.load %arg4[%c0_7, %c0_8] : memref<32x48xf32, #tpu.memory_space<vmem>>, vector<32x48xf32>
    %c0_9 = arith.constant 0 : index
    %c0_10 = arith.constant 0 : index
    %14 = vector.load %arg5[%c0_9, %c0_10] : memref<48x3xf32, #tpu.memory_space<vmem>>, vector<48x3xf32>
    %c0_11 = arith.constant 0 : index
    %c0_12 = arith.constant 0 : index
    %15 = vector.load %arg6[%c0_11, %c0_12] : memref<48x3xf32, #tpu.memory_space<vmem>>, vector<48x3xf32>
    %c0_13 = arith.constant 0 : index
    %c0_14 = arith.constant 0 : index
    %16 = vector.load %arg7[%c0_13, %c0_14] : memref<1x48xf32, #tpu.memory_space<vmem>>, vector<1x48xf32>
    %cst_15 = arith.constant dense<0.000000e+00> : vector<16x48xf32>
    %17 = tpu.matmul %6, %13, %cst_15 {dimension_numbers = #tpu.dot_dimension_numbers<[1], [0], [0], [1], [0, 0, 1, 1], [], []>} : vector<16x32xf32>, vector<32x48xf32>, vector<16x48xf32> -> vector<16x48xf32>
    %cst_16 = arith.constant dense<0.000000e+00> : vector<16x3xf32>
    %18 = tpu.matmul %17, %14, %cst_16 {dimension_numbers = #tpu.dot_dimension_numbers<[1], [0], [0], [1], [0, 0, 1, 1], [], []>} : vector<16x48xf32>, vector<48x3xf32>, vector<16x3xf32> -> vector<16x3xf32>
    %cst_17 = arith.constant dense<0.000000e+00> : vector<16x3xf32>
    %19 = tpu.matmul %17, %15, %cst_17 {dimension_numbers = #tpu.dot_dimension_numbers<[1], [0], [0], [1], [0, 0, 1, 1], [], []>} : vector<16x48xf32>, vector<48x3xf32>, vector<16x3xf32> -> vector<16x3xf32>
    %20 = vector.extract_strided_slice %18 {offsets = [0, 0], sizes = [16, 1], strides = [1, 1]} : vector<16x3xf32> to vector<16x1xf32>
    %21 = vector.extract_strided_slice %19 {offsets = [0, 0], sizes = [16, 1], strides = [1, 1]} : vector<16x3xf32> to vector<16x1xf32>
    %cst_18 = arith.constant 0.000000e+00 : f32
    %22 = vector.shape_cast %21 : vector<16x1xf32> to vector<16x1xf32>
    %23 = vector.broadcast %22 : vector<16x1xf32> to vector<16x16xf32>
    %24 = vector.broadcast %cst_18 : f32 to vector<16x16xf32>
    %25 = arith.select %2, %23, %24 : vector<16x16xi1>, vector<16x16xf32>
    %cst_19 = arith.constant dense<0.000000e+00> : vector<16xf32>
    %26 = vector.multi_reduction <add>, %25, %cst_19 [0] : vector<16x16xf32> to vector<16xf32>
    %27 = vector.shape_cast %26 : vector<16xf32> to vector<1x16xf32>
    %28 = vector.broadcast %20 : vector<16x1xf32> to vector<16x16xf32>
    %29 = vector.broadcast %27 : vector<1x16xf32> to vector<16x16xf32>
    %30 = arith.addf %28, %29 : vector<16x16xf32>
    %cst_20 = arith.constant 0.000000e+00 : f32
    %31 = vector.broadcast %cst_20 : f32 to vector<16x16xf32>
    %32 = arith.cmpf ogt, %30, %31 : vector<16x16xf32>
    %cst_21 = arith.constant 2.000000e-01 : f32
    %33 = vector.broadcast %cst_21 : f32 to vector<16x16xf32>
    %34 = arith.mulf %33, %30 : vector<16x16xf32>
    %35 = arith.select %32, %30, %34 : vector<16x16xi1>, vector<16x16xf32>
    %36 = arith.addf %35, %12 : vector<16x16xf32>
    %cst_22 = arith.constant dense<0xFF800000> : vector<16xf32>
    %37 = vector.multi_reduction <maximumf>, %36, %cst_22 [1] : vector<16x16xf32> to vector<16xf32>
    %38 = vector.shape_cast %37 : vector<16xf32> to vector<16x1xf32>
    %39 = vector.broadcast %38 : vector<16x1xf32> to vector<16x16xf32>
    %40 = arith.subf %36, %39 : vector<16x16xf32>
    %41 = math.exp %40 : vector<16x16xf32>
    %cst_23 = arith.constant dense<0.000000e+00> : vector<16xf32>
    %42 = vector.multi_reduction <add>, %41, %cst_23 [1] : vector<16x16xf32> to vector<16xf32>
    %43 = vector.shape_cast %42 : vector<16xf32> to vector<16x1xf32>
    %44 = tpu.reciprocal %43 {approx = true} : vector<16x1xf32> -> vector<16x1xf32>
    %45 = vector.broadcast %44 : vector<16x1xf32> to vector<16x16xf32>
    %46 = arith.mulf %41, %45 : vector<16x16xf32>
    %47 = vector.extract_strided_slice %17 {offsets = [0, 0], sizes = [16, 16], strides = [1, 1]} : vector<16x48xf32> to vector<16x16xf32>
    %cst_24 = arith.constant dense<0.000000e+00> : vector<16x16xf32>
    %48 = tpu.matmul %46, %47, %cst_24 {dimension_numbers = #tpu.dot_dimension_numbers<[1], [0], [0], [1], [0, 0, 1, 1], [], []>} : vector<16x16xf32>, vector<16x16xf32>, vector<16x16xf32> -> vector<16x16xf32>
    %49 = vector.extract_strided_slice %18 {offsets = [0, 1], sizes = [16, 1], strides = [1, 1]} : vector<16x3xf32> to vector<16x1xf32>
    %50 = vector.extract_strided_slice %19 {offsets = [0, 1], sizes = [16, 1], strides = [1, 1]} : vector<16x3xf32> to vector<16x1xf32>
    %cst_25 = arith.constant 0.000000e+00 : f32
    %51 = vector.shape_cast %50 : vector<16x1xf32> to vector<16x1xf32>
    %52 = vector.broadcast %51 : vector<16x1xf32> to vector<16x16xf32>
    %53 = vector.broadcast %cst_25 : f32 to vector<16x16xf32>
    %54 = arith.select %2, %52, %53 : vector<16x16xi1>, vector<16x16xf32>
    %cst_26 = arith.constant dense<0.000000e+00> : vector<16xf32>
    %55 = vector.multi_reduction <add>, %54, %cst_26 [0] : vector<16x16xf32> to vector<16xf32>
    %56 = vector.shape_cast %55 : vector<16xf32> to vector<1x16xf32>
    %57 = vector.broadcast %49 : vector<16x1xf32> to vector<16x16xf32>
    %58 = vector.broadcast %56 : vector<1x16xf32> to vector<16x16xf32>
    %59 = arith.addf %57, %58 : vector<16x16xf32>
    %cst_27 = arith.constant 0.000000e+00 : f32
    %60 = vector.broadcast %cst_27 : f32 to vector<16x16xf32>
    %61 = arith.cmpf ogt, %59, %60 : vector<16x16xf32>
    %cst_28 = arith.constant 2.000000e-01 : f32
    %62 = vector.broadcast %cst_28 : f32 to vector<16x16xf32>
    %63 = arith.mulf %62, %59 : vector<16x16xf32>
    %64 = arith.select %61, %59, %63 : vector<16x16xi1>, vector<16x16xf32>
    %65 = arith.addf %64, %12 : vector<16x16xf32>
    %cst_29 = arith.constant dense<0xFF800000> : vector<16xf32>
    %66 = vector.multi_reduction <maximumf>, %65, %cst_29 [1] : vector<16x16xf32> to vector<16xf32>
    %67 = vector.shape_cast %66 : vector<16xf32> to vector<16x1xf32>
    %68 = vector.broadcast %67 : vector<16x1xf32> to vector<16x16xf32>
    %69 = arith.subf %65, %68 : vector<16x16xf32>
    %70 = math.exp %69 : vector<16x16xf32>
    %cst_30 = arith.constant dense<0.000000e+00> : vector<16xf32>
    %71 = vector.multi_reduction <add>, %70, %cst_30 [1] : vector<16x16xf32> to vector<16xf32>
    %72 = vector.shape_cast %71 : vector<16xf32> to vector<16x1xf32>
    %73 = tpu.reciprocal %72 {approx = true} : vector<16x1xf32> -> vector<16x1xf32>
    %74 = vector.broadcast %73 : vector<16x1xf32> to vector<16x16xf32>
    %75 = arith.mulf %70, %74 : vector<16x16xf32>
    %76 = vector.extract_strided_slice %17 {offsets = [0, 16], sizes = [16, 16], strides = [1, 1]} : vector<16x48xf32> to vector<16x16xf32>
    %cst_31 = arith.constant dense<0.000000e+00> : vector<16x16xf32>
    %77 = tpu.matmul %75, %76, %cst_31 {dimension_numbers = #tpu.dot_dimension_numbers<[1], [0], [0], [1], [0, 0, 1, 1], [], []>} : vector<16x16xf32>, vector<16x16xf32>, vector<16x16xf32> -> vector<16x16xf32>
    %78 = vector.extract_strided_slice %18 {offsets = [0, 2], sizes = [16, 1], strides = [1, 1]} : vector<16x3xf32> to vector<16x1xf32>
    %79 = vector.extract_strided_slice %19 {offsets = [0, 2], sizes = [16, 1], strides = [1, 1]} : vector<16x3xf32> to vector<16x1xf32>
    %cst_32 = arith.constant 0.000000e+00 : f32
    %80 = vector.shape_cast %79 : vector<16x1xf32> to vector<16x1xf32>
    %81 = vector.broadcast %80 : vector<16x1xf32> to vector<16x16xf32>
    %82 = vector.broadcast %cst_32 : f32 to vector<16x16xf32>
    %83 = arith.select %2, %81, %82 : vector<16x16xi1>, vector<16x16xf32>
    %cst_33 = arith.constant dense<0.000000e+00> : vector<16xf32>
    %84 = vector.multi_reduction <add>, %83, %cst_33 [0] : vector<16x16xf32> to vector<16xf32>
    %85 = vector.shape_cast %84 : vector<16xf32> to vector<1x16xf32>
    %86 = vector.broadcast %78 : vector<16x1xf32> to vector<16x16xf32>
    %87 = vector.broadcast %85 : vector<1x16xf32> to vector<16x16xf32>
    %88 = arith.addf %86, %87 : vector<16x16xf32>
    %cst_34 = arith.constant 0.000000e+00 : f32
    %89 = vector.broadcast %cst_34 : f32 to vector<16x16xf32>
    %90 = arith.cmpf ogt, %88, %89 : vector<16x16xf32>
    %cst_35 = arith.constant 2.000000e-01 : f32
    %91 = vector.broadcast %cst_35 : f32 to vector<16x16xf32>
    %92 = arith.mulf %91, %88 : vector<16x16xf32>
    %93 = arith.select %90, %88, %92 : vector<16x16xi1>, vector<16x16xf32>
    %94 = arith.addf %93, %12 : vector<16x16xf32>
    %cst_36 = arith.constant dense<0xFF800000> : vector<16xf32>
    %95 = vector.multi_reduction <maximumf>, %94, %cst_36 [1] : vector<16x16xf32> to vector<16xf32>
    %96 = vector.shape_cast %95 : vector<16xf32> to vector<16x1xf32>
    %97 = vector.broadcast %96 : vector<16x1xf32> to vector<16x16xf32>
    %98 = arith.subf %94, %97 : vector<16x16xf32>
    %99 = math.exp %98 : vector<16x16xf32>
    %cst_37 = arith.constant dense<0.000000e+00> : vector<16xf32>
    %100 = vector.multi_reduction <add>, %99, %cst_37 [1] : vector<16x16xf32> to vector<16xf32>
    %101 = vector.shape_cast %100 : vector<16xf32> to vector<16x1xf32>
    %102 = tpu.reciprocal %101 {approx = true} : vector<16x1xf32> -> vector<16x1xf32>
    %103 = vector.broadcast %102 : vector<16x1xf32> to vector<16x16xf32>
    %104 = arith.mulf %99, %103 : vector<16x16xf32>
    %105 = vector.extract_strided_slice %17 {offsets = [0, 32], sizes = [16, 16], strides = [1, 1]} : vector<16x48xf32> to vector<16x16xf32>
    %cst_38 = arith.constant dense<0.000000e+00> : vector<16x16xf32>
    %106 = tpu.matmul %104, %105, %cst_38 {dimension_numbers = #tpu.dot_dimension_numbers<[1], [0], [0], [1], [0, 0, 1, 1], [], []>} : vector<16x16xf32>, vector<16x16xf32>, vector<16x16xf32> -> vector<16x16xf32>
    %107 = tpu.concatenate %48, %77, %106 in 1 : vector<16x16xf32>, vector<16x16xf32>, vector<16x16xf32> -> vector<16x48xf32>
    %108 = vector.broadcast %16 : vector<1x48xf32> to vector<16x48xf32>
    %109 = arith.addf %107, %108 : vector<16x48xf32>
    %110 = math.tanh %109 : vector<16x48xf32>
    %c0_39 = arith.constant 0 : index
    %c0_40 = arith.constant 0 : index
    %111 = vector.load %arg8[%c0_39, %c0_40] : memref<1x48xf32, #tpu.memory_space<vmem>>, vector<1x48xf32>
    %c0_41 = arith.constant 0 : index
    %c0_42 = arith.constant 0 : index
    %112 = vector.load %arg9[%c0_41, %c0_42] : memref<1x48xf32, #tpu.memory_space<vmem>>, vector<1x48xf32>
    %cst_43 = arith.constant dense<0.000000e+00> : vector<1xf32>
    %113 = vector.multi_reduction <add>, %4, %cst_43 [0] : vector<16x1xf32> to vector<1xf32>
    %114 = vector.shape_cast %113 : vector<1xf32> to vector<1x1xf32>
    %cst_44 = arith.constant 1.000000e+00 : f32
    %115 = vector.broadcast %cst_44 : f32 to vector<1x1xf32>
    %116 = arith.maximumf %114, %115 : vector<1x1xf32>
    %117 = tpu.reciprocal %116 {approx = true} : vector<1x1xf32> -> vector<1x1xf32>
    %118 = vector.broadcast %4 : vector<16x1xf32> to vector<16x48xf32>
    %119 = arith.mulf %110, %118 : vector<16x48xf32>
    %cst_45 = arith.constant dense<0.000000e+00> : vector<48xf32>
    %120 = vector.multi_reduction <add>, %119, %cst_45 [0] : vector<16x48xf32> to vector<48xf32>
    %121 = vector.shape_cast %120 : vector<48xf32> to vector<1x48xf32>
    %122 = vector.broadcast %117 : vector<1x1xf32> to vector<1x48xf32>
    %123 = arith.mulf %121, %122 : vector<1x48xf32>
    %124 = vector.broadcast %123 : vector<1x48xf32> to vector<16x48xf32>
    %125 = arith.subf %110, %124 : vector<16x48xf32>
    %126 = vector.broadcast %4 : vector<16x1xf32> to vector<16x48xf32>
    %127 = arith.mulf %125, %126 : vector<16x48xf32>
    %128 = arith.mulf %127, %127 : vector<16x48xf32>
    %cst_46 = arith.constant dense<0.000000e+00> : vector<48xf32>
    %129 = vector.multi_reduction <add>, %128, %cst_46 [0] : vector<16x48xf32> to vector<48xf32>
    %130 = vector.shape_cast %129 : vector<48xf32> to vector<1x48xf32>
    %131 = vector.broadcast %117 : vector<1x1xf32> to vector<1x48xf32>
    %132 = arith.mulf %130, %131 : vector<1x48xf32>
    %133 = vector.broadcast %123 : vector<1x48xf32> to vector<16x48xf32>
    %134 = arith.subf %110, %133 : vector<16x48xf32>
    %135 = vector.broadcast %111 : vector<1x48xf32> to vector<16x48xf32>
    %136 = arith.mulf %135, %134 : vector<16x48xf32>
    %cst_47 = arith.constant 9.99999974E-6 : f32
    %137 = vector.broadcast %cst_47 : f32 to vector<1x48xf32>
    %138 = arith.addf %132, %137 : vector<1x48xf32>
    %139 = math.rsqrt %138 : vector<1x48xf32>
    %140 = vector.broadcast %139 : vector<1x48xf32> to vector<16x48xf32>
    %141 = arith.mulf %136, %140 : vector<16x48xf32>
    %142 = vector.broadcast %112 : vector<1x48xf32> to vector<16x48xf32>
    %143 = arith.addf %141, %142 : vector<16x48xf32>
    %c0_48 = arith.constant 0 : index
    %c0_49 = arith.constant 0 : index
    %144 = vector.load %arg10[%c0_48, %c0_49] : memref<48x1xf32, #tpu.memory_space<vmem>>, vector<48x1xf32>
    %145 = arith.mulf %144, %144 : vector<48x1xf32>
    %cst_50 = arith.constant dense<0.000000e+00> : vector<1xf32>
    %146 = vector.multi_reduction <add>, %145, %cst_50 [0] : vector<48x1xf32> to vector<1xf32>
    %147 = vector.shape_cast %146 : vector<1xf32> to vector<1x1xf32>
    %148 = math.rsqrt %147 : vector<1x1xf32>
    %cst_51 = arith.constant dense<0.000000e+00> : vector<16x1xf32>
    %149 = tpu.matmul %143, %144, %cst_51 {dimension_numbers = #tpu.dot_dimension_numbers<[1], [0], [0], [1], [0, 0, 1, 1], [], []>} : vector<16x48xf32>, vector<48x1xf32>, vector<16x1xf32> -> vector<16x1xf32>
    %150 = vector.broadcast %148 : vector<1x1xf32> to vector<16x1xf32>
    %151 = arith.mulf %149, %150 : vector<16x1xf32>
    %152 = math.tanh %151 : vector<16x1xf32>
    %cst_52 = arith.constant 0.000000e+00 : f32
    %153 = vector.shape_cast %152 : vector<16x1xf32> to vector<16x1xf32>
    %154 = vector.broadcast %153 : vector<16x1xf32> to vector<16x16xf32>
    %155 = vector.broadcast %cst_52 : f32 to vector<16x16xf32>
    %156 = arith.select %2, %154, %155 : vector<16x16xi1>, vector<16x16xf32>
    %cst_53 = arith.constant dense<0.000000e+00> : vector<16xf32>
    %157 = vector.multi_reduction <add>, %156, %cst_53 [0] : vector<16x16xf32> to vector<16xf32>
    %158 = vector.shape_cast %157 : vector<16xf32> to vector<1x16xf32>
    %c0_54 = arith.constant 0 : index
    %c0_55 = arith.constant 0 : index
    %159 = vector.load %arg3[%c0_54, %c0_55] : memref<16x16xf32, #tpu.memory_space<vmem>>, vector<16x16xf32>
    %cst_56 = arith.constant 0.000000e+00 : f32
    %160 = vector.broadcast %cst_56 : f32 to vector<16x16xf32>
    %161 = arith.cmpf ogt, %159, %160 : vector<16x16xf32>
    %cst_57 = arith.constant 0.000000e+00 : f32
    %162 = vector.broadcast %cst_57 : f32 to vector<1x16xf32>
    %163 = arith.cmpf ogt, %5, %162 : vector<1x16xf32>
    %164 = vector.broadcast %163 : vector<1x16xi1> to vector<16x16xi1>
    %165 = arith.andi %161, %164 : vector<16x16xi1>
    %cst_58 = arith.constant 1.000000e+00 : f32
    %cst_59 = arith.constant 0.000000e+00 : f32
    %166 = vector.broadcast %cst_58 : f32 to vector<16x16xf32>
    %167 = vector.broadcast %cst_59 : f32 to vector<16x16xf32>
    %168 = arith.select %165, %166, %167 : vector<16x16xi1>, vector<16x16xf32>
    %cst_60 = arith.constant dense<0.000000e+00> : vector<16xf32>
    %169 = vector.multi_reduction <add>, %168, %cst_60 [1] : vector<16x16xf32> to vector<16xf32>
    %170 = vector.shape_cast %169 : vector<16xf32> to vector<16x1xf32>
    %cst_61 = arith.constant 0.699999988 : f32
    %171 = vector.broadcast %cst_61 : f32 to vector<16x1xf32>
    %172 = arith.mulf %171, %170 : vector<16x1xf32>
    %173 = math.ceil %172 : vector<16x1xf32>
    %cst_62 = arith.constant 0.000000e+00 : f32
    %174 = vector.broadcast %cst_62 : f32 to vector<16x16xf32>
    %175 = arith.cmpf ogt, %159, %174 : vector<16x16xf32>
    %cst_63 = arith.constant 0.000000e+00 : f32
    %176 = vector.broadcast %cst_63 : f32 to vector<16x1xf32>
    %177 = arith.cmpf ogt, %4, %176 : vector<16x1xf32>
    %178 = vector.broadcast %177 : vector<16x1xi1> to vector<16x16xi1>
    %179 = arith.andi %175, %178 : vector<16x16xi1>
    %cst_64 = arith.constant 0.000000e+00 : f32
    %180 = vector.broadcast %cst_64 : f32 to vector<1x16xf32>
    %181 = arith.cmpf ogt, %5, %180 : vector<1x16xf32>
    %182 = vector.broadcast %181 : vector<1x16xi1> to vector<16x16xi1>
    %183 = arith.andi %179, %182 : vector<16x16xi1>
    %184 = vector.broadcast %158 : vector<1x16xf32> to vector<16x16xf32>
    %185 = vector.broadcast %152 : vector<16x1xf32> to vector<16x16xf32>
    %186 = arith.cmpf ogt, %184, %185 : vector<16x16xf32>
    %187 = vector.broadcast %158 : vector<1x16xf32> to vector<16x16xf32>
    %188 = vector.broadcast %152 : vector<16x1xf32> to vector<16x16xf32>
    %189 = arith.cmpf oeq, %187, %188 : vector<16x16xf32>
    %190 = arith.cmpi slt, %1, %0 : vector<16x16xi32>
    %191 = arith.andi %189, %190 : vector<16x16xi1>
    %192 = arith.ori %186, %191 : vector<16x16xi1>
    %193 = arith.andi %183, %192 : vector<16x16xi1>
    %cst_65 = arith.constant 1.000000e+00 : f32
    %cst_66 = arith.constant 0.000000e+00 : f32
    %194 = vector.broadcast %cst_65 : f32 to vector<16x16xf32>
    %195 = vector.broadcast %cst_66 : f32 to vector<16x16xf32>
    %196 = arith.select %193, %194, %195 : vector<16x16xi1>, vector<16x16xf32>
    %cst_67 = arith.constant dense<0.000000e+00> : vector<16xf32>
    %197 = vector.multi_reduction <add>, %196, %cst_67 [1] : vector<16x16xf32> to vector<16xf32>
    %198 = vector.shape_cast %197 : vector<16xf32> to vector<16x1xf32>
    %cst_68 = arith.constant 0.000000e+00 : f32
    %199 = vector.broadcast %cst_68 : f32 to vector<16x1xf32>
    %200 = arith.cmpf ogt, %4, %199 : vector<16x1xf32>
    %201 = arith.cmpf olt, %198, %173 : vector<16x1xf32>
    %202 = arith.andi %200, %201 : vector<16x1xi1>
    %cst_69 = arith.constant 1.000000e+00 : f32
    %cst_70 = arith.constant 0.000000e+00 : f32
    %203 = vector.broadcast %cst_69 : f32 to vector<16x1xf32>
    %204 = vector.broadcast %cst_70 : f32 to vector<16x1xf32>
    %205 = arith.select %202, %203, %204 : vector<16x1xi1>, vector<16x1xf32>
    %cst_71 = arith.constant 0.000000e+00 : f32
    %206 = vector.shape_cast %205 : vector<16x1xf32> to vector<16x1xf32>
    %207 = vector.broadcast %206 : vector<16x1xf32> to vector<16x16xf32>
    %208 = vector.broadcast %cst_71 : f32 to vector<16x16xf32>
    %209 = arith.select %2, %207, %208 : vector<16x16xi1>, vector<16x16xf32>
    %cst_72 = arith.constant dense<0.000000e+00> : vector<16xf32>
    %210 = vector.multi_reduction <add>, %209, %cst_72 [0] : vector<16x16xf32> to vector<16xf32>
    %211 = vector.shape_cast %210 : vector<16xf32> to vector<1x16xf32>
    %212 = arith.mulf %152, %205 : vector<16x1xf32>
    %213 = vector.broadcast %212 : vector<16x1xf32> to vector<16x48xf32>
    %214 = arith.mulf %143, %213 : vector<16x48xf32>
    %215 = vector.broadcast %205 : vector<16x1xf32> to vector<16x16xf32>
    %216 = arith.mulf %3, %215 : vector<16x16xf32>
    %217 = vector.broadcast %211 : vector<1x16xf32> to vector<16x16xf32>
    %218 = arith.mulf %216, %217 : vector<16x16xf32>
    %cst_73 = arith.constant 0.000000e+00 : f32
    %219 = vector.broadcast %cst_73 : f32 to vector<16x48xf32>
    %220 = arith.maximumf %214, %219 : vector<16x48xf32>
    %cst_74 = arith.constant 0.000000e+00 : f32
    %221 = vector.broadcast %cst_74 : f32 to vector<16x16xf32>
    %222 = arith.cmpf ogt, %218, %221 : vector<16x16xf32>
    %223 = arith.ori %222, %2 : vector<16x16xi1>
    %cst_75 = arith.constant 0.000000e+00 : f32
    %cst_76 = arith.constant -1.000000e+30 : f32
    %224 = vector.broadcast %cst_75 : f32 to vector<16x16xf32>
    %225 = vector.broadcast %cst_76 : f32 to vector<16x16xf32>
    %226 = arith.select %223, %224, %225 : vector<16x16xi1>, vector<16x16xf32>
    %c0_77 = arith.constant 0 : index
    %c0_78 = arith.constant 0 : index
    %227 = vector.load %arg11[%c0_77, %c0_78] : memref<48x16xf32, #tpu.memory_space<vmem>>, vector<48x16xf32>
    %c0_79 = arith.constant 0 : index
    %c0_80 = arith.constant 0 : index
    %228 = vector.load %arg12[%c0_79, %c0_80] : memref<16x1xf32, #tpu.memory_space<vmem>>, vector<16x1xf32>
    %c0_81 = arith.constant 0 : index
    %c0_82 = arith.constant 0 : index
    %229 = vector.load %arg13[%c0_81, %c0_82] : memref<16x1xf32, #tpu.memory_space<vmem>>, vector<16x1xf32>
    %c0_83 = arith.constant 0 : index
    %c0_84 = arith.constant 0 : index
    %230 = vector.load %arg14[%c0_83, %c0_84] : memref<1x16xf32, #tpu.memory_space<vmem>>, vector<1x16xf32>
    %cst_85 = arith.constant dense<0.000000e+00> : vector<16x16xf32>
    %231 = tpu.matmul %220, %227, %cst_85 {dimension_numbers = #tpu.dot_dimension_numbers<[1], [0], [0], [1], [0, 0, 1, 1], [], []>} : vector<16x48xf32>, vector<48x16xf32>, vector<16x16xf32> -> vector<16x16xf32>
    %cst_86 = arith.constant dense<0.000000e+00> : vector<16x1xf32>
    %232 = tpu.matmul %231, %228, %cst_86 {dimension_numbers = #tpu.dot_dimension_numbers<[1], [0], [0], [1], [0, 0, 1, 1], [], []>} : vector<16x16xf32>, vector<16x1xf32>, vector<16x1xf32> -> vector<16x1xf32>
    %cst_87 = arith.constant dense<0.000000e+00> : vector<16x1xf32>
    %233 = tpu.matmul %231, %229, %cst_87 {dimension_numbers = #tpu.dot_dimension_numbers<[1], [0], [0], [1], [0, 0, 1, 1], [], []>} : vector<16x16xf32>, vector<16x1xf32>, vector<16x1xf32> -> vector<16x1xf32>
    %cst_88 = arith.constant 0.000000e+00 : f32
    %234 = vector.shape_cast %233 : vector<16x1xf32> to vector<16x1xf32>
    %235 = vector.broadcast %234 : vector<16x1xf32> to vector<16x16xf32>
    %236 = vector.broadcast %cst_88 : f32 to vector<16x16xf32>
    %237 = arith.select %2, %235, %236 : vector<16x16xi1>, vector<16x16xf32>
    %cst_89 = arith.constant dense<0.000000e+00> : vector<16xf32>
    %238 = vector.multi_reduction <add>, %237, %cst_89 [0] : vector<16x16xf32> to vector<16xf32>
    %239 = vector.shape_cast %238 : vector<16xf32> to vector<1x16xf32>
    %240 = vector.broadcast %232 : vector<16x1xf32> to vector<16x16xf32>
    %241 = vector.broadcast %239 : vector<1x16xf32> to vector<16x16xf32>
    %242 = arith.addf %240, %241 : vector<16x16xf32>
    %cst_90 = arith.constant 0.000000e+00 : f32
    %243 = vector.broadcast %cst_90 : f32 to vector<16x16xf32>
    %244 = arith.cmpf ogt, %242, %243 : vector<16x16xf32>
    %cst_91 = arith.constant 2.000000e-01 : f32
    %245 = vector.broadcast %cst_91 : f32 to vector<16x16xf32>
    %246 = arith.mulf %245, %242 : vector<16x16xf32>
    %247 = arith.select %244, %242, %246 : vector<16x16xi1>, vector<16x16xf32>
    %248 = arith.addf %247, %226 : vector<16x16xf32>
    %cst_92 = arith.constant dense<0xFF800000> : vector<16xf32>
    %249 = vector.multi_reduction <maximumf>, %248, %cst_92 [1] : vector<16x16xf32> to vector<16xf32>
    %250 = vector.shape_cast %249 : vector<16xf32> to vector<16x1xf32>
    %251 = vector.broadcast %250 : vector<16x1xf32> to vector<16x16xf32>
    %252 = arith.subf %248, %251 : vector<16x16xf32>
    %253 = math.exp %252 : vector<16x16xf32>
    %cst_93 = arith.constant dense<0.000000e+00> : vector<16xf32>
    %254 = vector.multi_reduction <add>, %253, %cst_93 [1] : vector<16x16xf32> to vector<16xf32>
    %255 = vector.shape_cast %254 : vector<16xf32> to vector<16x1xf32>
    %256 = tpu.reciprocal %255 {approx = true} : vector<16x1xf32> -> vector<16x1xf32>
    %257 = vector.broadcast %256 : vector<16x1xf32> to vector<16x16xf32>
    %258 = arith.mulf %253, %257 : vector<16x16xf32>
    %cst_94 = arith.constant dense<0.000000e+00> : vector<16x16xf32>
    %259 = tpu.matmul %258, %231, %cst_94 {dimension_numbers = #tpu.dot_dimension_numbers<[1], [0], [0], [1], [0, 0, 1, 1], [], []>} : vector<16x16xf32>, vector<16x16xf32>, vector<16x16xf32> -> vector<16x16xf32>
    %260 = vector.broadcast %230 : vector<1x16xf32> to vector<16x16xf32>
    %261 = arith.addf %259, %260 : vector<16x16xf32>
    %262 = math.tanh %261 : vector<16x16xf32>
    %c0_95 = arith.constant 0 : index
    %c0_96 = arith.constant 0 : index
    %263 = vector.load %arg15[%c0_95, %c0_96] : memref<1x16xf32, #tpu.memory_space<vmem>>, vector<1x16xf32>
    %c0_97 = arith.constant 0 : index
    %c0_98 = arith.constant 0 : index
    %264 = vector.load %arg16[%c0_97, %c0_98] : memref<1x16xf32, #tpu.memory_space<vmem>>, vector<1x16xf32>
    %cst_99 = arith.constant dense<0.000000e+00> : vector<1xf32>
    %265 = vector.multi_reduction <add>, %205, %cst_99 [0] : vector<16x1xf32> to vector<1xf32>
    %266 = vector.shape_cast %265 : vector<1xf32> to vector<1x1xf32>
    %cst_100 = arith.constant 1.000000e+00 : f32
    %267 = vector.broadcast %cst_100 : f32 to vector<1x1xf32>
    %268 = arith.maximumf %266, %267 : vector<1x1xf32>
    %269 = tpu.reciprocal %268 {approx = true} : vector<1x1xf32> -> vector<1x1xf32>
    %270 = vector.broadcast %205 : vector<16x1xf32> to vector<16x16xf32>
    %271 = arith.mulf %262, %270 : vector<16x16xf32>
    %cst_101 = arith.constant dense<0.000000e+00> : vector<16xf32>
    %272 = vector.multi_reduction <add>, %271, %cst_101 [0] : vector<16x16xf32> to vector<16xf32>
    %273 = vector.shape_cast %272 : vector<16xf32> to vector<1x16xf32>
    %274 = vector.broadcast %269 : vector<1x1xf32> to vector<1x16xf32>
    %275 = arith.mulf %273, %274 : vector<1x16xf32>
    %276 = vector.broadcast %275 : vector<1x16xf32> to vector<16x16xf32>
    %277 = arith.subf %262, %276 : vector<16x16xf32>
    %278 = vector.broadcast %205 : vector<16x1xf32> to vector<16x16xf32>
    %279 = arith.mulf %277, %278 : vector<16x16xf32>
    %280 = arith.mulf %279, %279 : vector<16x16xf32>
    %cst_102 = arith.constant dense<0.000000e+00> : vector<16xf32>
    %281 = vector.multi_reduction <add>, %280, %cst_102 [0] : vector<16x16xf32> to vector<16xf32>
    %282 = vector.shape_cast %281 : vector<16xf32> to vector<1x16xf32>
    %283 = vector.broadcast %269 : vector<1x1xf32> to vector<1x16xf32>
    %284 = arith.mulf %282, %283 : vector<1x16xf32>
    %285 = vector.broadcast %275 : vector<1x16xf32> to vector<16x16xf32>
    %286 = arith.subf %262, %285 : vector<16x16xf32>
    %287 = vector.broadcast %263 : vector<1x16xf32> to vector<16x16xf32>
    %288 = arith.mulf %287, %286 : vector<16x16xf32>
    %cst_103 = arith.constant 9.99999974E-6 : f32
    %289 = vector.broadcast %cst_103 : f32 to vector<1x16xf32>
    %290 = arith.addf %284, %289 : vector<1x16xf32>
    %291 = math.rsqrt %290 : vector<1x16xf32>
    %292 = vector.broadcast %291 : vector<1x16xf32> to vector<16x16xf32>
    %293 = arith.mulf %288, %292 : vector<16x16xf32>
    %294 = vector.broadcast %264 : vector<1x16xf32> to vector<16x16xf32>
    %295 = arith.addf %293, %294 : vector<16x16xf32>
    %c0_104 = arith.constant 0 : index
    %c0_105 = arith.constant 0 : index
    %296 = vector.load %arg17[%c0_104, %c0_105] : memref<16x1xf32, #tpu.memory_space<vmem>>, vector<16x1xf32>
    %297 = arith.mulf %296, %296 : vector<16x1xf32>
    %cst_106 = arith.constant dense<0.000000e+00> : vector<1xf32>
    %298 = vector.multi_reduction <add>, %297, %cst_106 [0] : vector<16x1xf32> to vector<1xf32>
    %299 = vector.shape_cast %298 : vector<1xf32> to vector<1x1xf32>
    %300 = math.rsqrt %299 : vector<1x1xf32>
    %cst_107 = arith.constant dense<0.000000e+00> : vector<16x1xf32>
    %301 = tpu.matmul %295, %296, %cst_107 {dimension_numbers = #tpu.dot_dimension_numbers<[1], [0], [0], [1], [0, 0, 1, 1], [], []>} : vector<16x16xf32>, vector<16x1xf32>, vector<16x1xf32> -> vector<16x1xf32>
    %302 = vector.broadcast %300 : vector<1x1xf32> to vector<16x1xf32>
    %303 = arith.mulf %301, %302 : vector<16x1xf32>
    %304 = math.tanh %303 : vector<16x1xf32>
    %cst_108 = arith.constant 0.000000e+00 : f32
    %305 = vector.shape_cast %304 : vector<16x1xf32> to vector<16x1xf32>
    %306 = vector.broadcast %305 : vector<16x1xf32> to vector<16x16xf32>
    %307 = vector.broadcast %cst_108 : f32 to vector<16x16xf32>
    %308 = arith.select %2, %306, %307 : vector<16x16xi1>, vector<16x16xf32>
    %cst_109 = arith.constant dense<0.000000e+00> : vector<16xf32>
    %309 = vector.multi_reduction <add>, %308, %cst_109 [0] : vector<16x16xf32> to vector<16xf32>
    %310 = vector.shape_cast %309 : vector<16xf32> to vector<1x16xf32>
    %c0_110 = arith.constant 0 : index
    %c0_111 = arith.constant 0 : index
    %311 = vector.load %arg3[%c0_110, %c0_111] : memref<16x16xf32, #tpu.memory_space<vmem>>, vector<16x16xf32>
    %cst_112 = arith.constant 0.000000e+00 : f32
    %312 = vector.broadcast %cst_112 : f32 to vector<16x16xf32>
    %313 = arith.cmpf ogt, %311, %312 : vector<16x16xf32>
    %cst_113 = arith.constant 0.000000e+00 : f32
    %314 = vector.broadcast %cst_113 : f32 to vector<1x16xf32>
    %315 = arith.cmpf ogt, %211, %314 : vector<1x16xf32>
    %316 = vector.broadcast %315 : vector<1x16xi1> to vector<16x16xi1>
    %317 = arith.andi %313, %316 : vector<16x16xi1>
    %cst_114 = arith.constant 1.000000e+00 : f32
    %cst_115 = arith.constant 0.000000e+00 : f32
    %318 = vector.broadcast %cst_114 : f32 to vector<16x16xf32>
    %319 = vector.broadcast %cst_115 : f32 to vector<16x16xf32>
    %320 = arith.select %317, %318, %319 : vector<16x16xi1>, vector<16x16xf32>
    %cst_116 = arith.constant dense<0.000000e+00> : vector<16xf32>
    %321 = vector.multi_reduction <add>, %320, %cst_116 [1] : vector<16x16xf32> to vector<16xf32>
    %322 = vector.shape_cast %321 : vector<16xf32> to vector<16x1xf32>
    %cst_117 = arith.constant 5.000000e-01 : f32
    %323 = vector.broadcast %cst_117 : f32 to vector<16x1xf32>
    %324 = arith.mulf %323, %322 : vector<16x1xf32>
    %325 = math.ceil %324 : vector<16x1xf32>
    %cst_118 = arith.constant 0.000000e+00 : f32
    %326 = vector.broadcast %cst_118 : f32 to vector<16x16xf32>
    %327 = arith.cmpf ogt, %311, %326 : vector<16x16xf32>
    %cst_119 = arith.constant 0.000000e+00 : f32
    %328 = vector.broadcast %cst_119 : f32 to vector<16x1xf32>
    %329 = arith.cmpf ogt, %205, %328 : vector<16x1xf32>
    %330 = vector.broadcast %329 : vector<16x1xi1> to vector<16x16xi1>
    %331 = arith.andi %327, %330 : vector<16x16xi1>
    %cst_120 = arith.constant 0.000000e+00 : f32
    %332 = vector.broadcast %cst_120 : f32 to vector<1x16xf32>
    %333 = arith.cmpf ogt, %211, %332 : vector<1x16xf32>
    %334 = vector.broadcast %333 : vector<1x16xi1> to vector<16x16xi1>
    %335 = arith.andi %331, %334 : vector<16x16xi1>
    %336 = vector.broadcast %310 : vector<1x16xf32> to vector<16x16xf32>
    %337 = vector.broadcast %304 : vector<16x1xf32> to vector<16x16xf32>
    %338 = arith.cmpf ogt, %336, %337 : vector<16x16xf32>
    %339 = vector.broadcast %310 : vector<1x16xf32> to vector<16x16xf32>
    %340 = vector.broadcast %304 : vector<16x1xf32> to vector<16x16xf32>
    %341 = arith.cmpf oeq, %339, %340 : vector<16x16xf32>
    %342 = arith.cmpi slt, %1, %0 : vector<16x16xi32>
    %343 = arith.andi %341, %342 : vector<16x16xi1>
    %344 = arith.ori %338, %343 : vector<16x16xi1>
    %345 = arith.andi %335, %344 : vector<16x16xi1>
    %cst_121 = arith.constant 1.000000e+00 : f32
    %cst_122 = arith.constant 0.000000e+00 : f32
    %346 = vector.broadcast %cst_121 : f32 to vector<16x16xf32>
    %347 = vector.broadcast %cst_122 : f32 to vector<16x16xf32>
    %348 = arith.select %345, %346, %347 : vector<16x16xi1>, vector<16x16xf32>
    %cst_123 = arith.constant dense<0.000000e+00> : vector<16xf32>
    %349 = vector.multi_reduction <add>, %348, %cst_123 [1] : vector<16x16xf32> to vector<16xf32>
    %350 = vector.shape_cast %349 : vector<16xf32> to vector<16x1xf32>
    %cst_124 = arith.constant 0.000000e+00 : f32
    %351 = vector.broadcast %cst_124 : f32 to vector<16x1xf32>
    %352 = arith.cmpf ogt, %205, %351 : vector<16x1xf32>
    %353 = arith.cmpf olt, %350, %325 : vector<16x1xf32>
    %354 = arith.andi %352, %353 : vector<16x1xi1>
    %cst_125 = arith.constant 1.000000e+00 : f32
    %cst_126 = arith.constant 0.000000e+00 : f32
    %355 = vector.broadcast %cst_125 : f32 to vector<16x1xf32>
    %356 = vector.broadcast %cst_126 : f32 to vector<16x1xf32>
    %357 = arith.select %354, %355, %356 : vector<16x1xi1>, vector<16x1xf32>
    %358 = arith.mulf %304, %357 : vector<16x1xf32>
    %359 = vector.broadcast %358 : vector<16x1xf32> to vector<16x16xf32>
    %360 = arith.mulf %295, %359 : vector<16x16xf32>
    %c0_127 = arith.constant 0 : index
    %c0_128 = arith.constant 0 : index
    %361 = vector.load %arg2[%c0_127, %c0_128] : memref<16x2xf32, #tpu.memory_space<vmem>>, vector<16x1xf32>
    %362 = arith.mulf %361, %357 : vector<16x1xf32>
    %cst_129 = arith.constant 0.000000e+00 : f32
    %363 = vector.broadcast %cst_129 : f32 to vector<16x1xf32>
    %364 = arith.cmpf ogt, %362, %363 : vector<16x1xf32>
    %cst_130 = arith.constant -1.000000e+30 : f32
    %365 = vector.shape_cast %364 : vector<16x1xi1> to vector<16x1xi1>
    %366 = vector.broadcast %365 : vector<16x1xi1> to vector<16x16xi1>
    %367 = vector.broadcast %cst_130 : f32 to vector<16x16xf32>
    %368 = arith.select %366, %360, %367 : vector<16x16xi1>, vector<16x16xf32>
    %cst_131 = arith.constant dense<0xFF800000> : vector<16xf32>
    %369 = vector.multi_reduction <maximumf>, %368, %cst_131 [0] : vector<16x16xf32> to vector<16xf32>
    %370 = vector.shape_cast %369 : vector<16xf32> to vector<1x16xf32>
    %c0_132 = arith.constant 0 : index
    %c1 = arith.constant 1 : index
    %371 = vector.load %arg2[%c0_132, %c1] : memref<16x2xf32, #tpu.memory_space<vmem>>, vector<16x1xf32>
    %372 = arith.mulf %371, %357 : vector<16x1xf32>
    %cst_133 = arith.constant 0.000000e+00 : f32
    %373 = vector.broadcast %cst_133 : f32 to vector<16x1xf32>
    %374 = arith.cmpf ogt, %372, %373 : vector<16x1xf32>
    %cst_134 = arith.constant -1.000000e+30 : f32
    %375 = vector.shape_cast %374 : vector<16x1xi1> to vector<16x1xi1>
    %376 = vector.broadcast %375 : vector<16x1xi1> to vector<16x16xi1>
    %377 = vector.broadcast %cst_134 : f32 to vector<16x16xf32>
    %378 = arith.select %376, %360, %377 : vector<16x16xi1>, vector<16x16xf32>
    %cst_135 = arith.constant dense<0xFF800000> : vector<16xf32>
    %379 = vector.multi_reduction <maximumf>, %378, %cst_135 [0] : vector<16x16xf32> to vector<16xf32>
    %380 = vector.shape_cast %379 : vector<16xf32> to vector<1x16xf32>
    %381 = tpu.concatenate %370, %380 in 0 : vector<1x16xf32>, vector<1x16xf32> -> vector<2x16xf32>
    %cst_136 = arith.constant 0.000000e+00 : f32
    %382 = vector.broadcast %cst_136 : f32 to vector<2x16xf32>
    %383 = arith.maximumf %381, %382 : vector<2x16xf32>
    %c0_137 = arith.constant 0 : index
    %c0_138 = arith.constant 0 : index
    %384 = vector.load %arg18[%c0_137, %c0_138] : memref<16x16xf32, #tpu.memory_space<vmem>>, vector<16x16xf32>
    %cst_139 = arith.constant dense<0.000000e+00> : vector<2x16xf32>
    %385 = tpu.matmul %383, %384, %cst_139 {dimension_numbers = #tpu.dot_dimension_numbers<[1], [0], [0], [1], [0, 0, 1, 1], [], []>} : vector<2x16xf32>, vector<16x16xf32>, vector<2x16xf32> -> vector<2x16xf32>
    %c0_140 = arith.constant 0 : index
    %c0_141 = arith.constant 0 : index
    %386 = vector.load %arg19[%c0_140, %c0_141] : memref<1x16xf32, #tpu.memory_space<vmem>>, vector<1x16xf32>
    %387 = vector.broadcast %386 : vector<1x16xf32> to vector<2x16xf32>
    %388 = arith.addf %385, %387 : vector<2x16xf32>
    %cst_142 = arith.constant 0.000000e+00 : f32
    %389 = vector.broadcast %cst_142 : f32 to vector<2x16xf32>
    %390 = arith.maximumf %388, %389 : vector<2x16xf32>
    %c0_143 = arith.constant 0 : index
    %c0_144 = arith.constant 0 : index
    %391 = vector.load %arg20[%c0_143, %c0_144] : memref<16x32xf32, #tpu.memory_space<vmem>>, vector<16x32xf32>
    %cst_145 = arith.constant dense<0.000000e+00> : vector<2x32xf32>
    %392 = tpu.matmul %390, %391, %cst_145 {dimension_numbers = #tpu.dot_dimension_numbers<[1], [0], [0], [1], [0, 0, 1, 1], [], []>} : vector<2x16xf32>, vector<16x32xf32>, vector<2x32xf32> -> vector<2x32xf32>
    %c0_146 = arith.constant 0 : index
    %c0_147 = arith.constant 0 : index
    %393 = vector.load %arg21[%c0_146, %c0_147] : memref<1x32xf32, #tpu.memory_space<vmem>>, vector<1x32xf32>
    %394 = vector.broadcast %393 : vector<1x32xf32> to vector<2x32xf32>
    %395 = arith.addf %392, %394 : vector<2x32xf32>
    %c0_148 = arith.constant 0 : index
    %c0_149 = arith.constant 0 : index
    %396 = vector.load %arg22[%c0_148, %c0_149] : memref<2x32xf32, #tpu.memory_space<vmem>>, vector<2x32xf32>
    tpu.vector_store %arg22[%c0_148, %c0_149], %395 {strides = array<i32>} : memref<2x32xf32, #tpu.memory_space<vmem>>, vector<2x32xf32>,
    return
  }
}

</mosaic_0001>

<llo_original>
// kernel: statement_encoder_forward.1
$region0: #{statement_encoder_forward.1}
  #allocation0 [shape = 'u32[]', space=smem, size = 0x4, offset = 0x4, fixed_abs, tag = 'smem constant byte address 0x4 - core index']
  #allocation1 [shape = 'u32[144,128]{1,0:T(1,128)}', space=vmem, size = 0x12000, scoped, tag = 'internal scratch']
  %s0 = inlined_call_operand.vmem [shape: f32[16,32], index: 0, kind: input, shape index: {}]
  %s1 = inlined_call_operand.vmem [shape: f32[16,16], index: 1, kind: input, shape index: {}]
  %s2 = inlined_call_operand.vmem [shape: f32[16,2], index: 2, kind: input, shape index: {}]
  %s3 = inlined_call_operand.vmem [shape: f32[16,16], index: 3, kind: input, shape index: {}]
  %s4 = inlined_call_operand.vmem [shape: f32[32,48], index: 4, kind: input, shape index: {}]
  %s5 = inlined_call_operand.vmem [shape: f32[48,3], index: 5, kind: input, shape index: {}]
  %s6 = inlined_call_operand.vmem [shape: f32[48,3], index: 6, kind: input, shape index: {}]
  %s7 = inlined_call_operand.vmem [shape: f32[1,48], index: 7, kind: input, shape index: {}]
  %s8 = inlined_call_operand.vmem [shape: f32[1,48], index: 8, kind: input, shape index: {}]
  %s9 = inlined_call_operand.vmem [shape: f32[1,48], index: 9, kind: input, shape index: {}]
  %s10 = inlined_call_operand.vmem [shape: f32[48,1], index: 10, kind: input, shape index: {}]
  %s11 = inlined_call_operand.vmem [shape: f32[48,16], index: 11, kind: input, shape index: {}]
  %s12 = inlined_call_operand.vmem [shape: f32[16,1], index: 12, kind: input, shape index: {}]
  %s13 = inlined_call_operand.vmem [shape: f32[16,1], index: 13, kind: input, shape index: {}]
  %s14 = inlined_call_operand.vmem [shape: f32[1,16], index: 14, kind: input, shape index: {}]
  %s15 = inlined_call_operand.vmem [shape: f32[1,16], index: 15, kind: input, shape index: {}]
  %s16 = inlined_call_operand.vmem [shape: f32[1,16], index: 16, kind: input, shape index: {}]
  %s17 = inlined_call_operand.vmem [shape: f32[16,1], index: 17, kind: input, shape index: {}]
  %s18 = inlined_call_operand.vmem [shape: f32[16,16], index: 18, kind: input, shape index: {}]
  %s19 = inlined_call_operand.vmem [shape: f32[1,16], index: 19, kind: input, shape index: {}]
  %s20 = inlined_call_operand.vmem [shape: f32[16,32], index: 20, kind: input, shape index: {}]
  %s21 = inlined_call_operand.vmem [shape: f32[1,32], index: 21, kind: input, shape index: {}]
  %s22 = inlined_call_operand.hbm [shape: f32[2,32], index: 22, kind: output, shape index: {}]
  %s23 = sld [smem:[#allocation0]]
  $region98: #{statement_encoder_forward.1} parent=0
    _
  %s25 = ssub.s32 1, %s23
  %s26 = scalar_select 0, %s25, %s23
  $region1: #{statement_encoder_forward.1} parent=0
    #allocation2 [shape = 'u8[1024]{0}', space=vmem, size = 0x400, scoped, tag = 'output window, operand 0, single buffered']
    #allocation3 [shape = 's32[1]{0}', space=sflag, size = 0x4, scoped, tag = 'scoped memory for statement_encoder_forward.1']
    %27 = vsyncpa [#allocation3], 0
    // Predicated region
    $region2: #{statement_encoder_forward.1} parent=1 // pred_check
      _
    $region3: #{statement_encoder_forward.1} parent=1 // pred_check_branch
      %29 = sbr.rel (0) target = $region5
    $region4: #{statement_encoder_forward.1} parent=1 // pred_region
      _
    $region5: #{statement_encoder_forward.1} parent=1 // pred_fallthru
      _
    // Predicated region
    $region6: #{statement_encoder_forward.1} parent=1 // pred_check
      _
    $region7: #{statement_encoder_forward.1} parent=1 // pred_check_branch
      %31 = sbr.rel (0) target = $region9
    $region8: #{statement_encoder_forward.1} parent=1 // pred_region
      _
    $region9: #{statement_encoder_forward.1} parent=1 // pred_fallthru
      _
    // Predicated region
    $region10: #{statement_encoder_forward.1} parent=1 // pred_check
      _
    $region11: #{statement_encoder_forward.1} parent=1 // pred_check_branch
      %33 = sbr.rel (0) target = $region13
    $region12: #{statement_encoder_forward.1} parent=1 // pred_region
      _
    $region13: #{statement_encoder_forward.1} parent=1 // pred_fallthru
      _
    // Predicated region
    $region14: #{statement_encoder_forward.1} parent=1 // pred_check
      _
    $region15: #{statement_encoder_forward.1} parent=1 // pred_check_branch
      %35 = sbr.rel (0) target = $region17
    $region16: #{statement_encoder_forward.1} parent=1 // pred_region
      _
    $region17: #{statement_encoder_forward.1} parent=1 // pred_fallthru
      _
    // Predicated region
    $region18: #{statement_encoder_forward.1} parent=1 // pred_check
      _
    $region19: #{statement_encoder_forward.1} parent=1 // pred_check_branch
      %37 = sbr.rel (0) target = $region21
    $region20: #{statement_encoder_forward.1} parent=1 // pred_region
      _
    $region21: #{statement_encoder_forward.1} parent=1 // pred_fallthru
      _
    // Predicated region
    $region22: #{statement_encoder_forward.1} parent=1 // pred_check
      _
    $region23: #{statement_encoder_forward.1} parent=1 // pred_check_branch
      %39 = sbr.rel (0) target = $region25
    $region24: #{statement_encoder_forward.1} parent=1 // pred_region
      _
    $region25: #{statement_encoder_forward.1} parent=1 // pred_fallthru
      _
    // Predicated region
    $region26: #{statement_encoder_forward.1} parent=1 // pred_check
      _
    $region27: #{statement_encoder_forward.1} parent=1 // pred_check_branch
      %41 = sbr.rel (0) target = $region29
    $region28: #{statement_encoder_forward.1} parent=1 // pred_region
      _
    $region29: #{statement_encoder_forward.1} parent=1 // pred_fallthru
      _
    // Predicated region
    $region30: #{statement_encoder_forward.1} parent=1 // pred_check
      _
    $region31: #{statement_encoder_forward.1} parent=1 // pred_check_branch
      %43 = sbr.rel (0) target = $region33
    $region32: #{statement_encoder_forward.1} parent=1 // pred_region
      _
    $region33: #{statement_encoder_forward.1} parent=1 // pred_fallthru
      _
    // Predicated region
    $region34: #{statement_encoder_forward.1} parent=1 // pred_check
      _
    $region35: #{statement_encoder_forward.1} parent=1 // pred_check_branch
      %45 = sbr.rel (0) target = $region37
    $region36: #{statement_encoder_forward.1} parent=1 // pred_region
      _
    $region37: #{statement_encoder_forward.1} parent=1 // pred_fallthru
      _
    // Predicated region
    $region38: #{statement_encoder_forward.1} parent=1 // pred_check
      _
    $region39: #{statement_encoder_forward.1} parent=1 // pred_check_branch
      %47 = sbr.rel (0) target = $region41
    $region40: #{statement_encoder_forward.1} parent=1 // pred_region
      _
    $region41: #{statement_encoder_forward.1} parent=1 // pred_fallthru
      _
    // Predicated region
    $region42: #{statement_encoder_forward.1} parent=1 // pred_check
      _
    $region43: #{statement_encoder_forward.1} parent=1 // pred_check_branch
      %49 = sbr.rel (0) target = $region45
    $region44: #{statement_encoder_forward.1} parent=1 // pred_region
      _
    $region45: #{statement_encoder_forward.1} parent=1 // pred_fallthru
      _
    // Predicated region
    $region46: #{statement_encoder_forward.1} parent=1 // pred_check
      _
    $region47: #{statement_encoder_forward.1} parent=1 // pred_check_branch
      %51 = sbr.rel (0) target = $region49
    $region48: #{statement_encoder_forward.1} parent=1 // pred_region
      _
    $region49: #{statement_encoder_forward.1} parent=1 // pred_fallthru
      _
    // Predicated region
    $region50: #{statement_encoder_forward.1} parent=1 // pred_check
      _
    $region51: #{statement_encoder_forward.1} parent=1 // pred_check_branch
      %53 = sbr.rel (0) target = $region53
    $region52: #{statement_encoder_forward.1} parent=1 // pred_region
      _
    $region53: #{statement_encoder_forward.1} parent=1 // pred_fallthru
      _
    // Predicated region
    $region54: #{statement_encoder_forward.1} parent=1 // pred_check
      _
    $region55: #{statement_encoder_forward.1} parent=1 // pred_check_branch
      %55 = sbr.rel (0) target = $region57
    $region56: #{statement_encoder_forward.1} parent=1 // pred_region
      _
    $region57: #{statement_encoder_forward.1} parent=1 // pred_fallthru
      _
    // Predicated region
    $region58: #{statement_encoder_forward.1} parent=1 // pred_check
      _
    $region59: #{statement_encoder_forward.1} parent=1 // pred_check_branch
      %57 = sbr.rel (0) target = $region61
    $region60: #{statement_encoder_forward.1} parent=1 // pred_region
      _
    $region61: #{statement_encoder_forward.1} parent=1 // pred_fallthru
      _
    // Predicated region
    $region62: #{statement_encoder_forward.1} parent=1 // pred_check
      _
    $region63: #{statement_encoder_forward.1} parent=1 // pred_check_branch
      %59 = sbr.rel (0) target = $region65
    $region64: #{statement_encoder_forward.1} parent=1 // pred_region
      _
    $region65: #{statement_encoder_forward.1} parent=1 // pred_fallthru
      _
    // Predicated region
    $region66: #{statement_encoder_forward.1} parent=1 // pred_check
      _
    $region67: #{statement_encoder_forward.1} parent=1 // pred_check_branch
      %61 = sbr.rel (0) target = $region69
    $region68: #{statement_encoder_forward.1} parent=1 // pred_region
      _
    $region69: #{statement_encoder_forward.1} parent=1 // pred_fallthru
      _
    // Predicated region
    $region70: #{statement_encoder_forward.1} parent=1 // pred_check
      _
    $region71: #{statement_encoder_forward.1} parent=1 // pred_check_branch
      %63 = sbr.rel (0) target = $region73
    $region72: #{statement_encoder_forward.1} parent=1 // pred_region
      _
    $region73: #{statement_encoder_forward.1} parent=1 // pred_fallthru
      _
    // Predicated region
    $region74: #{statement_encoder_forward.1} parent=1 // pred_check
      _
    $region75: #{statement_encoder_forward.1} parent=1 // pred_check_branch
      %65 = sbr.rel (0) target = $region77
    $region76: #{statement_encoder_forward.1} parent=1 // pred_region
      _
    $region77: #{statement_encoder_forward.1} parent=1 // pred_fallthru
      _
    // Predicated region
    $region78: #{statement_encoder_forward.1} parent=1 // pred_check
      _
    $region79: #{statement_encoder_forward.1} parent=1 // pred_check_branch
      %67 = sbr.rel (0) target = $region81
    $region80: #{statement_encoder_forward.1} parent=1 // pred_region
      _
    $region81: #{statement_encoder_forward.1} parent=1 // pred_fallthru
      _
    // Predicated region
    $region82: #{statement_encoder_forward.1} parent=1 // pred_check
      _
    $region83: #{statement_encoder_forward.1} parent=1 // pred_check_branch
      %69 = sbr.rel (0) target = $region85
    $region84: #{statement_encoder_forward.1} parent=1 // pred_region
      _
    $region85: #{statement_encoder_forward.1} parent=1 // pred_fallthru
      _
    // Predicated region
    $region86: #{statement_encoder_forward.1} parent=1 // pred_check
      _
    $region87: #{statement_encoder_forward.1} parent=1 // pred_check_branch
      %71 = sbr.rel (0) target = $region89
    $region88: #{statement_encoder_forward.1} parent=1 // pred_region
      _
    $region89: #{statement_encoder_forward.1} parent=1 // pred_fallthru
      _
    %v72 = vlaneseq
    %v73 = vshrl.u32 %v72, 7
    %v74 = vadd.s32 %v73, 8
    %v75 = vlaneseq
    %v76 = vand.u32 %v75, 127
    %vm77 = vcmp.eq.s32.totalorder %v73, %v76
    %vm78 = vcmp.eq.s32.totalorder %v74, %v76
    %v79 = vld [vmem:[%s1] sm:$0xff]
    %v80 = vld [vmem:[%s1 + $0x8] sm:$0xff]
    %v81 = vld [vmem:[%s0] sm:$0xff]
    %v82 = vld [vmem:[%s0 + $0x8] sm:$0xff]
    %vm83 = vcmp.gt.f32.partialorder %v79, 0.0
    %vm84 = vcmp.gt.f32.partialorder %v80, 0.0
    %vm85 = vmor %vm83, %vm77
    %vm86 = vmor %vm84, %vm78
    %v87 = vsel %vm85, 0.0, -1e+30
    %v88 = vsel %vm86, 0.0, -1e+30
    %v89 = vld [vmem:[%s4] sm:$0xff]
    %v90 = vld [vmem:[%s4 + $0x8] sm:$0xff]
    %v91 = vld [vmem:[%s4 + $0x10] sm:$0xff]
    %v92 = vld [vmem:[%s4 + $0x18] sm:$0xff]
    %v93 = vld [vmem:[%s5] sm:$0xff]
    %v94 = vld [vmem:[%s5 + $0x8] sm:$0xff]
    %v95 = vld [vmem:[%s5 + $0x10] sm:$0xff]
    %v96 = vld [vmem:[%s5 + $0x18] sm:$0xff]
    %v97 = vld [vmem:[%s5 + $0x20] sm:$0xff]
    %v98 = vld [vmem:[%s5 + $0x28] sm:$0xff]
    %v99 = vld [vmem:[%s6] sm:$0xff]
    %v100 = vld [vmem:[%s6 + $0x8] sm:$0xff]
    %v101 = vld [vmem:[%s6 + $0x10] sm:$0xff]
    %v102 = vld [vmem:[%s6 + $0x18] sm:$0xff]
    %v103 = vld [vmem:[%s6 + $0x20] sm:$0xff]
    %v104 = vld [vmem:[%s6 + $0x28] sm:$0xff]
    %v105 = vld [vmem:[%s7] sm:$0x1]
    %vm106 = vcmask 261120
    %v108 = vsel %vm106, %v81, 0
    %v111 = vsel %vm106, %v82, 0
    %113 = vmatprep.subr.mxu0 0.0
    %114 = vmatpush1.msra.mxu0 %v89
    %115 = vmatprep.subr.mxu0 0.0
    %116 = vmatpush1.msra.mxu0 %v90
    %117 = vmatprep.subr.mxu0 0.0
    %118 = vmatpush1.msra.mxu0 %v91
    %119 = vmatprep.subr.mxu0 0.0
    %120 = vmatpush1.msra.mxu0 %v92
    %121 = vmatprep.subr.mxu0 0.0
    %122 = vmatpush1.msra.mxu0 0.0
    %123 = vmatprep.subr.mxu0 0.0
    %124 = vmatpush1.msra.mxu0 0.0
    %125 = vmatprep.subr.mxu0 0.0
    %126 = vmatpush1.msra.mxu0 0.0
    %127 = vmatprep.subr.mxu0 0.0
    %128 = vmatpush1.msra.mxu0 0.0
    %129 = vmatprep.subr.mxu0 0.0
    %130 = vmatpush1.msra.mxu0 0.0
    %131 = vmatprep.subr.mxu0 0.0
    %132 = vmatpush1.msra.mxu0 0.0
    %133 = vmatprep.subr.mxu0 0.0
    %134 = vmatpush1.msra.mxu0 0.0
    %135 = vmatprep.subr.mxu0 0.0
    %136 = vmatpush1.msra.mxu0 0.0
    %137 = vmatprep.subr.mxu0 0.0
    %138 = vmatpush1.msra.mxu0 0.0
    %139 = vmatprep.subr.mxu0 0.0
    %140 = vmatpush1.msra.mxu0 0.0
    %141 = vmatprep.subr.mxu0 0.0
    %142 = vmatpush1.msra.mxu0 0.0
    %143 = vmatprep.subr.mxu0 0.0
    %144 = vmatpush1.msra.mxu0 0.0
    %145 = vmatprep.subr.mxu0 0.0
    %146 = vmatpush1.msra.mxu0 0.0
    %147 = vmatprep.subr.mxu0 0.0
    %148 = vmatpush1.msra.mxu0 0.0
    %149 = vmatprep.subr.mxu0 0.0
    %150 = vmatpush1.msra.mxu0 0.0
    %151 = vmatprep.subr.mxu0 0.0
    %152 = vmatpush1.msra.mxu0 0.0
    %153 = vmatprep.subr.mxu0 0.0
    %154 = vmatpush1.msra.mxu0 0.0
    %155 = vmatprep.subr.mxu0 0.0
    %156 = vmatpush1.msra.mxu0 0.0
    %157 = vmatprep.subr.mxu0 0.0
    %158 = vmatpush1.msra.mxu0 0.0
    %159 = vmatprep.subr.mxu0 0.0
    %160 = vmatpush1.msra.mxu0 0.0
    %161 = vmatprep.subr.mxu0 0.0
    %162 = vmatpush1.msra.mxu0 0.0
    %163 = vmatprep.subr.mxu0 0.0
    %164 = vmatpush1.msra.mxu0 0.0
    %165 = vmatprep.subr.mxu0 0.0
    %166 = vmatpush1.msra.mxu0 0.0
    %167 = vmatprep.subr.mxu0 0.0
    %168 = vmatpush1.msra.mxu0 0.0
    %169 = vmatprep.subr.mxu0 0.0
    %170 = vmatpush1.msra.mxu0 0.0
    %171 = vmatprep.subr.mxu0 0.0
    %172 = vmatpush1.msra.mxu0 0.0
    %173 = vmatprep.subr.mxu0 0.0
    %174 = vmatpush1.msra.mxu0 0.0
    %175 = vmatprep.subr.mxu0 0.0
    %176 = vmatpush1.msra.mxu0 0.0
    %177 = vmatprep.mubr.f32.mxu0 0.0
    %178 = vmatmul.mubr.f32.gmra.mrb[0].mxu0 %v108
    %v179 = vpop.f32.mrb[0].mxu0
    %v180 = vadd.f32 0.0, %v179
    %v181 = vpop.f32.mrb[0].mxu0
    %182 = vmatprep.mubr.f32.mxu0 0.0
    %183 = vmatmul.mubr.f32.gmra.mrb[0].mxu0 %v111
    %v184 = vpop.f32.mrb[0].mxu0
    %v185 = vadd.f32 0.0, %v184
    %v186 = vpop.f32.mrb[0].mxu0
    %187 = vdwg.mxu0
    %vm188 = vcmask 392192
    %v190 = vsel %vm188, %v180, 0
    %v193 = vsel %vm188, %v185, 0
    %195 = vmatprep.subr.mxu0 0.0
    %196 = vmatpush1.msra.mxu0 %v93
    %197 = vmatprep.subr.mxu0 0.0
    %198 = vmatpush1.msra.mxu0 %v94
    %199 = vmatprep.subr.mxu0 0.0
    %200 = vmatpush1.msra.mxu0 %v95
    %201 = vmatprep.subr.mxu0 0.0
    %202 = vmatpush1.msra.mxu0 %v96
    %203 = vmatprep.subr.mxu0 0.0
    %204 = vmatpush1.msra.mxu0 %v97
    %205 = vmatprep.subr.mxu0 0.0
    %206 = vmatpush1.msra.mxu0 %v98
    %207 = vmatprep.subr.mxu0 0.0
    %208 = vmatpush1.msra.mxu0 0.0
    %209 = vmatprep.subr.mxu0 0.0
    %210 = vmatpush1.msra.mxu0 0.0
    %211 = vmatprep.subr.mxu0 0.0
    %212 = vmatpush1.msra.mxu0 0.0
    %213 = vmatprep.subr.mxu0 0.0
    %214 = vmatpush1.msra.mxu0 0.0
    %215 = vmatprep.subr.mxu0 0.0
    %216 = vmatpush1.msra.mxu0 0.0
    %217 = vmatprep.subr.mxu0 0.0
    %218 = vmatpush1.msra.mxu0 0.0
    %219 = vmatprep.subr.mxu0 0.0
    %220 = vmatpush1.msra.mxu0 0.0
    %221 = vmatprep.subr.mxu0 0.0
    %222 = vmatpush1.msra.mxu0 0.0
    %223 = vmatprep.subr.mxu0 0.0
    %224 = vmatpush1.msra.mxu0 0.0
    %225 = vmatprep.subr.mxu0 0.0
    %226 = vmatpush1.msra.mxu0 0.0
    %227 = vmatprep.subr.mxu0 0.0
    %228 = vmatpush1.msra.mxu0 0.0
    %229 = vmatprep.subr.mxu0 0.0
    %230 = vmatpush1.msra.mxu0 0.0
    %231 = vmatprep.subr.mxu0 0.0
    %232 = vmatpush1.msra.mxu0 0.0
    %233 = vmatprep.subr.mxu0 0.0
    %234 = vmatpush1.msra.mxu0 0.0
    %235 = vmatprep.subr.mxu0 0.0
    %236 = vmatpush1.msra.mxu0 0.0
    %237 = vmatprep.subr.mxu0 0.0
    %238 = vmatpush1.msra.mxu0 0.0
    %239 = vmatprep.subr.mxu0 0.0
    %240 = vmatpush1.msra.mxu0 0.0
    %241 = vmatprep.subr.mxu0 0.0
    %242 = vmatpush1.msra.mxu0 0.0
    %243 = vmatprep.subr.mxu0 0.0
    %244 = vmatpush1.msra.mxu0 0.0
    %245 = vmatprep.subr.mxu0 0.0
    %246 = vmatpush1.msra.mxu0 0.0
    %247 = vmatprep.subr.mxu0 0.0
    %248 = vmatpush1.msra.mxu0 0.0
    %249 = vmatprep.subr.mxu0 0.0
    %250 = vmatpush1.msra.mxu0 0.0
    %251 = vmatprep.subr.mxu0 0.0
    %252 = vmatpush1.msra.mxu0 0.0
    %253 = vmatprep.subr.mxu0 0.0
    %254 = vmatpush1.msra.mxu0 0.0
    %255 = vmatprep.subr.mxu0 0.0
    %256 = vmatpush1.msra.mxu0 0.0
    %257 = vmatprep.subr.mxu0 0.0
    %258 = vmatpush1.msra.mxu0 0.0
    %259 = vmatprep.mubr.f32.mxu0 0.0
    %260 = vmatmul.mubr.f32.gmra.mrb[0].mxu0 %v190
    %v261 = vpop.f32.mrb[0].mxu0
    %v262 = vadd.f32 0.0, %v261
    %v263 = vpop.f32.mrb[0].mxu0
    %264 = vmatprep.mubr.f32.mxu0 0.0
    %265 = vmatmul.mubr.f32.gmra.mrb[0].mxu0 %v193
    %v266 = vpop.f32.mrb[0].mxu0
    %v267 = vadd.f32 0.0, %v266
    %v268 = vpop.f32.mrb[0].mxu0
    %269 = vdwg.mxu0
    %270 = vmatprep.subr.mxu0 0.0
    %271 = vmatpush1.msra.mxu0 %v99
    %272 = vmatprep.subr.mxu0 0.0
    %273 = vmatpush1.msra.mxu0 %v100
    %274 = vmatprep.subr.mxu0 0.0
    %275 = vmatpush1.msra.mxu0 %v101
    %276 = vmatprep.subr.mxu0 0.0
    %277 = vmatpush1.msra.mxu0 %v102
    %278 = vmatprep.subr.mxu0 0.0
    %279 = vmatpush1.msra.mxu0 %v103
    %280 = vmatprep.subr.mxu0 0.0
    %281 = vmatpush1.msra.mxu0 %v104
    %282 = vmatprep.subr.mxu0 0.0
    %283 = vmatpush1.msra.mxu0 0.0
    %284 = vmatprep.subr.mxu0 0.0
    %285 = vmatpush1.msra.mxu0 0.0
    %286 = vmatprep.subr.mxu0 0.0
    %287 = vmatpush1.msra.mxu0 0.0
    %288 = vmatprep.subr.mxu0 0.0
    %289 = vmatpush1.msra.mxu0 0.0
    %290 = vmatprep.subr.mxu0 0.0
    %291 = vmatpush1.msra.mxu0 0.0
    %292 = vmatprep.subr.mxu0 0.0
    %293 = vmatpush1.msra.mxu0 0.0
    %294 = vmatprep.subr.mxu0 0.0
    %295 = vmatpush1.msra.mxu0 0.0
    %296 = vmatprep.subr.mxu0 0.0
    %297 = vmatpush1.msra.mxu0 0.0
    %298 = vmatprep.subr.mxu0 0.0
    %299 = vmatpush1.msra.mxu0 0.0
    %300 = vmatprep.subr.mxu0 0.0
    %301 = vmatpush1.msra.mxu0 0.0
    %302 = vmatprep.subr.mxu0 0.0
    %303 = vmatpush1.msra.mxu0 0.0
    %304 = vmatprep.subr.mxu0 0.0
    %305 = vmatpush1.msra.mxu0 0.0
    %306 = vmatprep.subr.mxu0 0.0
    %307 = vmatpush1.msra.mxu0 0.0
    %308 = vmatprep.subr.mxu0 0.0
    %309 = vmatpush1.msra.mxu0 0.0
    %310 = vmatprep.subr.mxu0 0.0
    %311 = vmatpush1.msra.mxu0 0.0
    %312 = vmatprep.subr.mxu0 0.0
    %313 = vmatpush1.msra.mxu0 0.0
    %314 = vmatprep.subr.mxu0 0.0
    %315 = vmatpush1.msra.mxu0 0.0
    %316 = vmatprep.subr.mxu0 0.0
    %317 = vmatpush1.msra.mxu0 0.0
    %318 = vmatprep.subr.mxu0 0.0
    %319 = vmatpush1.msra.mxu0 0.0
    %320 = vmatprep.subr.mxu0 0.0
    %321 = vmatpush1.msra.mxu0 0.0
    %322 = vmatprep.subr.mxu0 0.0
    %323 = vmatpush1.msra.mxu0 0.0
    %324 = vmatprep.subr.mxu0 0.0
    %325 = vmatpush1.msra.mxu0 0.0
    %326 = vmatprep.subr.mxu0 0.0
    %327 = vmatpush1.msra.mxu0 0.0
    %328 = vmatprep.subr.mxu0 0.0
    %329 = vmatpush1.msra.mxu0 0.0
    %330 = vmatprep.subr.mxu0 0.0
    %331 = vmatpush1.msra.mxu0 0.0
    %332 = vmatprep.subr.mxu0 0.0
    %333 = vmatpush1.msra.mxu0 0.0
    %334 = vmatprep.mubr.f32.mxu0 0.0
    %335 = vmatmul.mubr.f32.gmra.mrb[0].mxu0 %v190
    %v336 = vpop.f32.mrb[0].mxu0
    %v337 = vadd.f32 0.0, %v336
    %v338 = vpop.f32.mrb[0].mxu0
    %339 = vmatprep.mubr.f32.mxu0 0.0
    %340 = vmatmul.mubr.f32.gmra.mrb[0].mxu0 %v193
    %v341 = vpop.f32.mrb[0].mxu0
    %v342 = vadd.f32 0.0, %v341
    %v343 = vpop.f32.mrb[0].mxu0
    %344 = vdwg.mxu0
    %346 = vset.pattern.permute.xlu0 0
    %347 = vperm.xlu0 %346, %v337
    %v348 = vpop.permute.xlu0 %347
    %351 = vset.pattern.permute.xlu0 0
    %352 = vperm.xlu0 %351, %v342
    %v353 = vpop.permute.xlu0 %352
    %v355 = vsel %vm77, %v348, 0.0
    %v356 = vsel %vm78, %v353, 0.0
    %vm357 = vcmask 130048
    %v358 = vsel %vm357, %v355, 0.0
    %v359 = vsel %vm357, %v356, 0.0
    %v360 = vadd.f32 %v358, %v359
    %v361 = vrot.slane %v360, 4
    %v362 = vadd.f32 %v360, %v361
    %v363 = vrot.slane %v362, 2
    %v364 = vadd.f32 %v362, %v363
    %v365 = vrot.slane %v364, 1
    %v366 = vadd.f32 %v364, %v365
    %368 = vset.pattern.permute.xlu0 0
    %369 = vperm.xlu0 %368, %v262
    %v370 = vpop.permute.xlu0 %369
    %373 = vset.pattern.permute.xlu0 0
    %374 = vperm.xlu0 %373, %v267
    %v375 = vpop.permute.xlu0 %374
    %v377 = vadd.f32 %v370, %v366
    %v378 = vadd.f32 %v375, %v366
    %vm379 = vcmp.gt.f32.partialorder %v377, 0.0
    %vm380 = vcmp.gt.f32.partialorder %v378, 0.0
    %v381 = vmul.f32 %v377, 0.2
    %v382 = vmul.f32 %v378, 0.2
    %v383 = vsel %vm379, %v377, %v381
    %v384 = vsel %vm380, %v378, %v382
    %v385 = vadd.f32 %v383, %v87
    %v386 = vadd.f32 %v384, %v88
    %v387 = vsel %vm357, %v385, -inf
    %388 = vmax.xlane.f32.xlu0 %v387
    %v389 = vpop.xlane.xlu0 %388
    %v390 = vsel %vm357, %v386, -inf
    %391 = vmax.xlane.f32.xlu0 %v390
    %v392 = vpop.xlane.xlu0 %391
    %v393 = vsub.f32 %v385, %v389
    %v394 = vsub.f32 %v386, %v392
    %v395 = vmul.f32 %v393, 1.442695
    %v396 = vpow.pop %v395
    %v397 = vmul.f32 %v394, 1.442695
    %v398 = vpow.pop %v397
    %v399 = vsel %vm357, %v396, 0.0
    %400 = vadd.xlane.f32.xlu0 %v399
    %v401 = vpop.xlane.xlu0 %400
    %v402 = vsel %vm357, %v398, 0.0
    %403 = vadd.xlane.f32.xlu0 %v402
    %v404 = vpop.xlane.xlu0 %403
    %v405 = vrcp.pop %v401
    %v406 = vrcp.pop %v404
    %v407 = vmul.f32 %v396, %v405
    %v408 = vmul.f32 %v398, %v406
    %v410 = vsel %vm357, %v407, 0
    %v413 = vsel %vm357, %v408, 0
    %415 = vmatprep.subr.mxu0 0.0
    %416 = vmatpush1.msra.mxu0 %v180
    %417 = vmatprep.subr.mxu0 0.0
    %418 = vmatpush1.msra.mxu0 %v185
    %419 = vmatprep.subr.mxu0 0.0
    %420 = vmatpush1.msra.mxu0 0.0
    %421 = vmatprep.subr.mxu0 0.0
    %422 = vmatpush1.msra.mxu0 0.0
    %423 = vmatprep.subr.mxu0 0.0
    %424 = vmatpush1.msra.mxu0 0.0
    %425 = vmatprep.subr.mxu0 0.0
    %426 = vmatpush1.msra.mxu0 0.0
    %427 = vmatprep.subr.mxu0 0.0
    %428 = vmatpush1.msra.mxu0 0.0
    %429 = vmatprep.subr.mxu0 0.0
    %430 = vmatpush1.msra.mxu0 0.0
    %431 = vmatprep.subr.mxu0 0.0
    %432 = vmatpush1.msra.mxu0 0.0
    %433 = vmatprep.subr.mxu0 0.0
    %434 = vmatpush1.msra.mxu0 0.0
    %435 = vmatprep.subr.mxu0 0.0
    %436 = vmatpush1.msra.mxu0 0.0
    %437 = vmatprep.subr.mxu0 0.0
    %438 = vmatpush1.msra.mxu0 0.0
    %439 = vmatprep.subr.mxu0 0.0
    %440 = vmatpush1.msra.mxu0 0.0
    %441 = vmatprep.subr.mxu0 0.0
    %442 = vmatpush1.msra.mxu0 0.0
    %443 = vmatprep.subr.mxu0 0.0
    %444 = vmatpush1.msra.mxu0 0.0
    %445 = vmatprep.subr.mxu0 0.0
    %446 = vmatpush1.msra.mxu0 0.0
    %447 = vmatprep.subr.mxu0 0.0
    %448 = vmatpush1.msra.mxu0 0.0
    %449 = vmatprep.subr.mxu0 0.0
    %450 = vmatpush1.msra.mxu0 0.0
    %451 = vmatprep.subr.mxu0 0.0
    %452 = vmatpush1.msra.mxu0 0.0
    %453 = vmatprep.subr.mxu0 0.0
    %454 = vmatpush1.msra.mxu0 0.0
    %455 = vmatprep.subr.mxu0 0.0
    %456 = vmatpush1.msra.mxu0 0.0
    %457 = vmatprep.subr.mxu0 0.0
    %458 = vmatpush1.msra.mxu0 0.0
    %459 = vmatprep.subr.mxu0 0.0
    %460 = vmatpush1.msra.mxu0 0.0
    %461 = vmatprep.subr.mxu0 0.0
    %462 = vmatpush1.msra.mxu0 0.0
    %463 = vmatprep.subr.mxu0 0.0
    %464 = vmatpush1.msra.mxu0 0.0
    %465 = vmatprep.subr.mxu0 0.0
    %466 = vmatpush1.msra.mxu0 0.0
    %467 = vmatprep.subr.mxu0 0.0
    %468 = vmatpush1.msra.mxu0 0.0
    %469 = vmatprep.subr.mxu0 0.0
    %470 = vmatpush1.msra.mxu0 0.0
    %471 = vmatprep.subr.mxu0 0.0
    %472 = vmatpush1.msra.mxu0 0.0
    %473 = vmatprep.subr.mxu0 0.0
    %474 = vmatpush1.msra.mxu0 0.0
    %475 = vmatprep.subr.mxu0 0.0
    %476 = vmatpush1.msra.mxu0 0.0
    %477 = vmatprep.subr.mxu0 0.0
    %478 = vmatpush1.msra.mxu0 0.0
    %479 = vmatprep.mubr.f32.mxu0 0.0
    %480 = vmatmul.mubr.f32.gmra.mrb[0].mxu0 %v410
    %v481 = vpop.f32.mrb[0].mxu0
    %v482 = vadd.f32 0.0, %v481
    %v483 = vpop.f32.mrb[0].mxu0
    %484 = vmatprep.mubr.f32.mxu0 0.0
    %485 = vmatmul.mubr.f32.gmra.mrb[0].mxu0 %v413
    %v486 = vpop.f32.mrb[0].mxu0
    %v487 = vadd.f32 0.0, %v486
    %v488 = vpop.f32.mrb[0].mxu0
    %489 = vdwg.mxu0
    %490 = vset.pattern.permute.xlu0 1
    %491 = vperm.xlu0 %490, %v337
    %v492 = vpop.permute.xlu0 %491
    %494 = vset.pattern.permute.xlu0 1
    %495 = vperm.xlu0 %494, %v342
    %v496 = vpop.permute.xlu0 %495
    %v498 = vsel %vm77, %v492, 0.0
    %v499 = vsel %vm78, %v496, 0.0
    %v500 = vsel %vm357, %v498, 0.0
    %v501 = vsel %vm357, %v499, 0.0
    %v502 = vadd.f32 %v500, %v501
    %v503 = vrot.slane %v502, 4
    %v504 = vadd.f32 %v502, %v503
    %v505 = vrot.slane %v504, 2
    %v506 = vadd.f32 %v504, %v505
    %v507 = vrot.slane %v506, 1
    %v508 = vadd.f32 %v506, %v507
    %509 = vset.pattern.permute.xlu0 1
    %510 = vperm.xlu0 %509, %v262
    %v511 = vpop.permute.xlu0 %510
    %513 = vset.pattern.permute.xlu0 1
    %514 = vperm.xlu0 %513, %v267
    %v515 = vpop.permute.xlu0 %514
    %v517 = vadd.f32 %v511, %v508
    %v518 = vadd.f32 %v515, %v508
    %vm519 = vcmp.gt.f32.partialorder %v517, 0.0
    %vm520 = vcmp.gt.f32.partialorder %v518, 0.0
    %v521 = vmul.f32 %v517, 0.2
    %v522 = vmul.f32 %v518, 0.2
    %v523 = vsel %vm519, %v517, %v521
    %v524 = vsel %vm520, %v518, %v522
    %v525 = vadd.f32 %v523, %v87
    %v526 = vadd.f32 %v524, %v88
    %v527 = vsel %vm357, %v525, -inf
    %528 = vmax.xlane.f32.xlu0 %v527
    %v529 = vpop.xlane.xlu0 %528
    %v530 = vsel %vm357, %v526, -inf
    %531 = vmax.xlane.f32.xlu0 %v530
    %v532 = vpop.xlane.xlu0 %531
    %v533 = vsub.f32 %v525, %v529
    %v534 = vsub.f32 %v526, %v532
    %v535 = vmul.f32 %v533, 1.442695
    %v536 = vpow.pop %v535
    %v537 = vmul.f32 %v534, 1.442695
    %v538 = vpow.pop %v537
    %v539 = vsel %vm357, %v536, 0.0
    %540 = vadd.xlane.f32.xlu0 %v539
    %v541 = vpop.xlane.xlu0 %540
    %v542 = vsel %vm357, %v538, 0.0
    %543 = vadd.xlane.f32.xlu0 %v542
    %v544 = vpop.xlane.xlu0 %543
    %v545 = vrcp.pop %v541
    %v546 = vrcp.pop %v544
    %v547 = vmul.f32 %v536, %v545
    %v548 = vmul.f32 %v538, %v546
    %549 = vrot.lane.b32.xlu0 %v180, 112
    %v550 = vpop.permute.xlu0 %549
    %551 = vrot.lane.b32.xlu0 %v185, 112
    %v552 = vpop.permute.xlu0 %551
    %v556 = vsel %vm357, %v547, 0
    %v559 = vsel %vm357, %v548, 0
    %561 = vmatprep.subr.mxu0 0.0
    %562 = vmatpush1.msra.mxu0 %v550
    %563 = vmatprep.subr.mxu0 0.0
    %564 = vmatpush1.msra.mxu0 %v552
    %565 = vmatprep.subr.mxu0 0.0
    %566 = vmatpush1.msra.mxu0 0.0
    %567 = vmatprep.subr.mxu0 0.0
    %568 = vmatpush1.msra.mxu0 0.0
    %569 = vmatprep.subr.mxu0 0.0
    %570 = vmatpush1.msra.mxu0 0.0
    %571 = vmatprep.subr.mxu0 0.0
    %572 = vmatpush1.msra.mxu0 0.0
    %573 = vmatprep.subr.mxu0 0.0
    %574 = vmatpush1.msra.mxu0 0.0
    %575 = vmatprep.subr.mxu0 0.0
    %576 = vmatpush1.msra.mxu0 0.0
    %577 = vmatprep.subr.mxu0 0.0
    %578 = vmatpush1.msra.mxu0 0.0
    %579 = vmatprep.subr.mxu0 0.0
    %580 = vmatpush1.msra.mxu0 0.0
    %581 = vmatprep.subr.mxu0 0.0
    %582 = vmatpush1.msra.mxu0 0.0
    %583 = vmatprep.subr.mxu0 0.0
    %584 = vmatpush1.msra.mxu0 0.0
    %585 = vmatprep.subr.mxu0 0.0
    %586 = vmatpush1.msra.mxu0 0.0
    %587 = vmatprep.subr.mxu0 0.0
    %588 = vmatpush1.msra.mxu0 0.0
    %589 = vmatprep.subr.mxu0 0.0
    %590 = vmatpush1.msra.mxu0 0.0
    %591 = vmatprep.subr.mxu0 0.0
    %592 = vmatpush1.msra.mxu0 0.0
    %593 = vmatprep.subr.mxu0 0.0
    %594 = vmatpush1.msra.mxu0 0.0
    %595 = vmatprep.subr.mxu0 0.0
    %596 = vmatpush1.msra.mxu0 0.0
    %597 = vmatprep.subr.mxu0 0.0
    %598 = vmatpush1.msra.mxu0 0.0
    %599 = vmatprep.subr.mxu0 0.0
    %600 = vmatpush1.msra.mxu0 0.0
    %601 = vmatprep.subr.mxu0 0.0
    %602 = vmatpush1.msra.mxu0 0.0
    %603 = vmatprep.subr.mxu0 0.0
    %604 = vmatpush1.msra.mxu0 0.0
    %605 = vmatprep.subr.mxu0 0.0
    %606 = vmatpush1.msra.mxu0 0.0
    %607 = vmatprep.subr.mxu0 0.0
    %608 = vmatpush1.msra.mxu0 0.0
    %609 = vmatprep.subr.mxu0 0.0
    %610 = vmatpush1.msra.mxu0 0.0
    %611 = vmatprep.subr.mxu0 0.0
    %612 = vmatpush1.msra.mxu0 0.0
    %613 = vmatprep.subr.mxu0 0.0
    %614 = vmatpush1.msra.mxu0 0.0
    %615 = vmatprep.subr.mxu0 0.0
    %616 = vmatpush1.msra.mxu0 0.0
    %617 = vmatprep.subr.mxu0 0.0
    %618 = vmatpush1.msra.mxu0 0.0
    %619 = vmatprep.subr.mxu0 0.0
    %620 = vmatpush1.msra.mxu0 0.0
    %621 = vmatprep.subr.mxu0 0.0
    %622 = vmatpush1.msra.mxu0 0.0
    %623 = vmatprep.subr.mxu0 0.0
    %624 = vmatpush1.msra.mxu0 0.0
    %625 = vmatprep.mubr.f32.mxu0 0.0
    %626 = vmatmul.mubr.f32.gmra.mrb[0].mxu0 %v556
    %v627 = vpop.f32.mrb[0].mxu0
    %v628 = vadd.f32 0.0, %v627
    %v629 = vpop.f32.mrb[0].mxu0
    %630 = vmatprep.mubr.f32.mxu0 0.0
    %631 = vmatmul.mubr.f32.gmra.mrb[0].mxu0 %v559
    %v632 = vpop.f32.mrb[0].mxu0
    %v633 = vadd.f32 0.0, %v632
    %v634 = vpop.f32.mrb[0].mxu0
    %635 = vdwg.mxu0
    %636 = vset.pattern.permute.xlu0 2
    %637 = vperm.xlu0 %636, %v337
    %v638 = vpop.permute.xlu0 %637
    %640 = vset.pattern.permute.xlu0 2
    %641 = vperm.xlu0 %640, %v342
    %v642 = vpop.permute.xlu0 %641
    %v644 = vsel %vm77, %v638, 0.0
    %v645 = vsel %vm78, %v642, 0.0
    %v646 = vsel %vm357, %v644, 0.0
    %v647 = vsel %vm357, %v645, 0.0
    %v648 = vadd.f32 %v646, %v647
    %v649 = vrot.slane %v648, 4
    %v650 = vadd.f32 %v648, %v649
    %v651 = vrot.slane %v650, 2
    %v652 = vadd.f32 %v650, %v651
    %v653 = vrot.slane %v652, 1
    %v654 = vadd.f32 %v652, %v653
    %655 = vset.pattern.permute.xlu0 2
    %656 = vperm.xlu0 %655, %v262
    %v657 = vpop.permute.xlu0 %656
    %659 = vset.pattern.permute.xlu0 2
    %660 = vperm.xlu0 %659, %v267
    %v661 = vpop.permute.xlu0 %660
    %v663 = vadd.f32 %v657, %v654
    %v664 = vadd.f32 %v661, %v654
    %vm665 = vcmp.gt.f32.partialorder %v663, 0.0
    %vm666 = vcmp.gt.f32.partialorder %v664, 0.0
    %v667 = vmul.f32 %v663, 0.2
    %v668 = vmul.f32 %v664, 0.2
    %v669 = vsel %vm665, %v663, %v667
    %v670 = vsel %vm666, %v664, %v668
    %v671 = vadd.f32 %v669, %v87
    %v672 = vadd.f32 %v670, %v88
    %v673 = vsel %vm357, %v671, -inf
    %674 = vmax.xlane.f32.xlu0 %v673
    %v675 = vpop.xlane.xlu0 %674
    %v676 = vsel %vm357, %v672, -inf
    %677 = vmax.xlane.f32.xlu0 %v676
    %v678 = vpop.xlane.xlu0 %677
    %v679 = vsub.f32 %v671, %v675
    %v680 = vsub.f32 %v672, %v678
    %v681 = vmul.f32 %v679, 1.442695
    %v682 = vpow.pop %v681
    %v683 = vmul.f32 %v680, 1.442695
    %v684 = vpow.pop %v683
    %v685 = vsel %vm357, %v682, 0.0
    %686 = vadd.xlane.f32.xlu0 %v685
    %v687 = vpop.xlane.xlu0 %686
    %v688 = vsel %vm357, %v684, 0.0
    %689 = vadd.xlane.f32.xlu0 %v688
    %v690 = vpop.xlane.xlu0 %689
    %v691 = vrcp.pop %v687
    %v692 = vrcp.pop %v690
    %v693 = vmul.f32 %v682, %v691
    %v694 = vmul.f32 %v684, %v692
    %695 = vrot.lane.b32.xlu0 %v180, 96
    %v696 = vpop.permute.xlu0 %695
    %697 = vrot.lane.b32.xlu0 %v185, 96
    %v698 = vpop.permute.xlu0 %697
    %v702 = vsel %vm357, %v693, 0
    %v705 = vsel %vm357, %v694, 0
    %707 = vmatprep.subr.mxu0 0.0
    %708 = vmatpush1.msra.mxu0 %v696
    %709 = vmatprep.subr.mxu0 0.0
    %710 = vmatpush1.msra.mxu0 %v698
    %711 = vmatprep.subr.mxu0 0.0
    %712 = vmatpush1.msra.mxu0 0.0
    %713 = vmatprep.subr.mxu0 0.0
    %714 = vmatpush1.msra.mxu0 0.0
    %715 = vmatprep.subr.mxu0 0.0
    %716 = vmatpush1.msra.mxu0 0.0
    %717 = vmatprep.subr.mxu0 0.0
    %718 = vmatpush1.msra.mxu0 0.0
    %719 = vmatprep.subr.mxu0 0.0
    %720 = vmatpush1.msra.mxu0 0.0
    %721 = vmatprep.subr.mxu0 0.0
    %722 = vmatpush1.msra.mxu0 0.0
    %723 = vmatprep.subr.mxu0 0.0
    %724 = vmatpush1.msra.mxu0 0.0
    %725 = vmatprep.subr.mxu0 0.0
    %726 = vmatpush1.msra.mxu0 0.0
    %727 = vmatprep.subr.mxu0 0.0
    %728 = vmatpush1.msra.mxu0 0.0
    %729 = vmatprep.subr.mxu0 0.0
    %730 = vmatpush1.msra.mxu0 0.0
    %731 = vmatprep.subr.mxu0 0.0
    %732 = vmatpush1.msra.mxu0 0.0
    %733 = vmatprep.subr.mxu0 0.0
    %734 = vmatpush1.msra.mxu0 0.0
    %735 = vmatprep.subr.mxu0 0.0
    %736 = vmatpush1.msra.mxu0 0.0
    %737 = vmatprep.subr.mxu0 0.0
    %738 = vmatpush1.msra.mxu0 0.0
    %739 = vmatprep.subr.mxu0 0.0
    %740 = vmatpush1.msra.mxu0 0.0
    %741 = vmatprep.subr.mxu0 0.0
    %742 = vmatpush1.msra.mxu0 0.0
    %743 = vmatprep.subr.mxu0 0.0
    %744 = vmatpush1.msra.mxu0 0.0
    %745 = vmatprep.subr.mxu0 0.0
    %746 = vmatpush1.msra.mxu0 0.0
    %747 = vmatprep.subr.mxu0 0.0
    %748 = vmatpush1.msra.mxu0 0.0
    %749 = vmatprep.subr.mxu0 0.0
    %750 = vmatpush1.msra.mxu0 0.0
    %751 = vmatprep.subr.mxu0 0.0
    %752 = vmatpush1.msra.mxu0 0.0
    %753 = vmatprep.subr.mxu0 0.0
    %754 = vmatpush1.msra.mxu0 0.0
    %755 = vmatprep.subr.mxu0 0.0
    %756 = vmatpush1.msra.mxu0 0.0
    %757 = vmatprep.subr.mxu0 0.0
    %758 = vmatpush1.msra.mxu0 0.0
    %759 = vmatprep.subr.mxu0 0.0
    %760 = vmatpush1.msra.mxu0 0.0
    %761 = vmatprep.subr.mxu0 0.0
    %762 = vmatpush1.msra.mxu0 0.0
    %763 = vmatprep.subr.mxu0 0.0
    %764 = vmatpush1.msra.mxu0 0.0
    %765 = vmatprep.subr.mxu0 0.0
    %766 = vmatpush1.msra.mxu0 0.0
    %767 = vmatprep.subr.mxu0 0.0
    %768 = vmatpush1.msra.mxu0 0.0
    %769 = vmatprep.subr.mxu0 0.0
    %770 = vmatpush1.msra.mxu0 0.0
    %771 = vmatprep.mubr.f32.mxu0 0.0
    %772 = vmatmul.mubr.f32.gmra.mrb[0].mxu0 %v702
    %v773 = vpop.f32.mrb[0].mxu0
    %v774 = vadd.f32 0.0, %v773
    %v775 = vpop.f32.mrb[0].mxu0
    %776 = vmatprep.mubr.f32.mxu0 0.0
    %777 = vmatmul.mubr.f32.gmra.mrb[0].mxu0 %v705
    %v778 = vpop.f32.mrb[0].mxu0
    %v779 = vadd.f32 0.0, %v778
    %v780 = vpop.f32.mrb[0].mxu0
    %781 = vdwg.mxu0
    %784 = vrot.lane.b32.xlu0 %v628, 16
    %v785 = vpop.permute.xlu0 %784
    %786 = vrot.lane.b32.xlu0 %v633, 16
    %v787 = vpop.permute.xlu0 %786
    %792 = vrot.lane.b32.xlu0 %v774, 32
    %v793 = vpop.permute.xlu0 %792
    %794 = vrot.lane.b32.xlu0 %v779, 32
    %v795 = vpop.permute.xlu0 %794
    %v798 = vsel %vm357, %v482, %v785
    %v799 = vsel %vm357, %v487, %v787
    %v800 = vsel %vm106, %v798, %v793
    %v801 = vsel %vm106, %v799, %v795
    %v803 = vlaneseq
    %v804 = vshrl.u32 %v803, 7
    %v805 = vsub.s32 0, %v804
    %v806 = vrot.slane %v105, %v805
    %v808 = vadd.f32 %v800, %v806
    %v809 = vadd.f32 %v801, %v806
    %v810 = vtanh.pop %v808
    %v811 = vtanh.pop %v809
    %v812 = vld [vmem:[%s8] sm:$0x1]
    %v813 = vld [vmem:[%s9] sm:$0x1]
    %v814 = vmax.f32 16.0, 1.0
    %v815 = vrcp.pop %v814
    %v816 = vsel %vm188, %v810, 0.0
    %v817 = vsel %vm188, %v811, 0.0
    %v818 = vadd.f32 %v816, %v817
    %v819 = vrot.slane %v818, 4
    %v820 = vadd.f32 %v818, %v819
    %v821 = vrot.slane %v820, 2
    %v822 = vadd.f32 %v820, %v821
    %v823 = vrot.slane %v822, 1
    %v824 = vadd.f32 %v822, %v823
    %v825 = vmul.f32 %v824, %v815
    %v826 = vsub.f32 %v810, %v825
    %v827 = vsub.f32 %v811, %v825
    %v828 = vmul.f32 %v826, %v826
    %v829 = vmul.f32 %v827, %v827
    %v830 = vsel %vm188, %v828, 0.0
    %v831 = vsel %vm188, %v829, 0.0
    %v832 = vadd.f32 %v830, %v831
    %v833 = vrot.slane %v832, 4
    %v834 = vadd.f32 %v832, %v833
    %v835 = vrot.slane %v834, 2
    %v836 = vadd.f32 %v834, %v835
    %v837 = vrot.slane %v836, 1
    %v838 = vadd.f32 %v836, %v837
    %v839 = vmul.f32 %v838, %v815
    %v841 = vlaneseq
    %v842 = vshrl.u32 %v841, 7
    %v843 = vsub.s32 0, %v842
    %v844 = vrot.slane %v812, %v843
    %v846 = vmul.f32 %v844, %v826
    %v847 = vmul.f32 %v844, %v827
    %v848 = vadd.f32 %v839, 1e-05
    %v849 = vrsqrt.pop %v848
    %v850 = vmul.f32 %v846, %v849
    %v851 = vmul.f32 %v847, %v849
    %v853 = vlaneseq
    %v854 = vshrl.u32 %v853, 7
    %v855 = vsub.s32 0, %v854
    %v856 = vrot.slane %v813, %v855
    %v858 = vadd.f32 %v850, %v856
    %v859 = vadd.f32 %v851, %v856
    %v860 = vld [vmem:[%s10] sm:$0xff]
    %v861 = vld [vmem:[%s10 + $0x8] sm:$0xff]
    %v862 = vld [vmem:[%s10 + $0x10] sm:$0xff]
    %v863 = vld [vmem:[%s10 + $0x18] sm:$0xff]
    %v864 = vld [vmem:[%s10 + $0x20] sm:$0xff]
    %v865 = vld [vmem:[%s10 + $0x28] sm:$0xff]
    %v866 = vmul.f32 %v860, %v860
    %v867 = vmul.f32 %v861, %v861
    %v868 = vmul.f32 %v862, %v862
    %v869 = vmul.f32 %v863, %v863
    %v870 = vmul.f32 %v864, %v864
    %v871 = vmul.f32 %v865, %v865
    %vm872 = vcmask 7168
    %v873 = vsel %vm872, %v866, 0.0
    %v874 = vsel %vm872, %v867, 0.0
    %v875 = vadd.f32 %v873, %v874
    %v876 = vsel %vm872, %v868, 0.0
    %v877 = vadd.f32 %v875, %v876
    %v878 = vsel %vm872, %v869, 0.0
    %v879 = vadd.f32 %v877, %v878
    %v880 = vsel %vm872, %v870, 0.0
    %v881 = vadd.f32 %v879, %v880
    %v882 = vsel %vm872, %v871, 0.0
    %v883 = vadd.f32 %v881, %v882
    %v884 = vrot.slane %v883, 4
    %v885 = vadd.f32 %v883, %v884
    %v886 = vrot.slane %v885, 2
    %v887 = vadd.f32 %v885, %v886
    %v888 = vrot.slane %v887, 1
    %v889 = vadd.f32 %v887, %v888
    %v890 = vrsqrt.pop %v889
    %v892 = vsel %vm188, %v858, 0
    %v895 = vsel %vm188, %v859, 0
    %897 = vmatprep.subr.mxu0 0.0
    %898 = vmatpush1.msra.mxu0 %v860
    %899 = vmatprep.subr.mxu0 0.0
    %900 = vmatpush1.msra.mxu0 %v861
    %901 = vmatprep.subr.mxu0 0.0
    %902 = vmatpush1.msra.mxu0 %v862
    %903 = vmatprep.subr.mxu0 0.0
    %904 = vmatpush1.msra.mxu0 %v863
    %905 = vmatprep.subr.mxu0 0.0
    %906 = vmatpush1.msra.mxu0 %v864
    %907 = vmatprep.subr.mxu0 0.0
    %908 = vmatpush1.msra.mxu0 %v865
    %909 = vmatprep.subr.mxu0 0.0
    %910 = vmatpush1.msra.mxu0 0.0
    %911 = vmatprep.subr.mxu0 0.0
    %912 = vmatpush1.msra.mxu0 0.0
    %913 = vmatprep.subr.mxu0 0.0
    %914 = vmatpush1.msra.mxu0 0.0
    %915 = vmatprep.subr.mxu0 0.0
    %916 = vmatpush1.msra.mxu0 0.0
    %917 = vmatprep.subr.mxu0 0.0
    %918 = vmatpush1.msra.mxu0 0.0
    %919 = vmatprep.subr.mxu0 0.0
    %920 = vmatpush1.msra.mxu0 0.0
    %921 = vmatprep.subr.mxu0 0.0
    %922 = vmatpush1.msra.mxu0 0.0
    %923 = vmatprep.subr.mxu0 0.0
    %924 = vmatpush1.msra.mxu0 0.0
    %925 = vmatprep.subr.mxu0 0.0
    %926 = vmatpush1.msra.mxu0 0.0
    %927 = vmatprep.subr.mxu0 0.0
    %928 = vmatpush1.msra.mxu0 0.0
    %929 = vmatprep.subr.mxu0 0.0
    %930 = vmatpush1.msra.mxu0 0.0
    %931 = vmatprep.subr.mxu0 0.0
    %932 = vmatpush1.msra.mxu0 0.0
    %933 = vmatprep.subr.mxu0 0.0
    %934 = vmatpush1.msra.mxu0 0.0
    %935 = vmatprep.subr.mxu0 0.0
    %936 = vmatpush1.msra.mxu0 0.0
    %937 = vmatprep.subr.mxu0 0.0
    %938 = vmatpush1.msra.mxu0 0.0
    %939 = vmatprep.subr.mxu0 0.0
    %940 = vmatpush1.msra.mxu0 0.0
    %941 = vmatprep.subr.mxu0 0.0
    %942 = vmatpush1.msra.mxu0 0.0
    %943 = vmatprep.subr.mxu0 0.0
    %944 = vmatpush1.msra.mxu0 0.0
    %945 = vmatprep.subr.mxu0 0.0
    %946 = vmatpush1.msra.mxu0 0.0
    %947 = vmatprep.subr.mxu0 0.0
    %948 = vmatpush1.msra.mxu0 0.0
    %949 = vmatprep.subr.mxu0 0.0
    %950 = vmatpush1.msra.mxu0 0.0
    %951 = vmatprep.subr.mxu0 0.0
    %952 = vmatpush1.msra.mxu0 0.0
    %953 = vmatprep.subr.mxu0 0.0
    %954 = vmatpush1.msra.mxu0 0.0
    %955 = vmatprep.subr.mxu0 0.0
    %956 = vmatpush1.msra.mxu0 0.0
    %957 = vmatprep.subr.mxu0 0.0
    %958 = vmatpush1.msra.mxu0 0.0
    %959 = vmatprep.subr.mxu0 0.0
    %960 = vmatpush1.msra.mxu0 0.0
    %961 = vmatprep.mubr.f32.mxu0 0.0
    %962 = vmatmul.mubr.f32.gmra.mrb[0].mxu0 %v892
    %v963 = vpop.f32.mrb[0].mxu0
    %v964 = vadd.f32 0.0, %v963
    %v965 = vpop.f32.mrb[0].mxu0
    %966 = vmatprep.mubr.f32.mxu0 0.0
    %967 = vmatmul.mubr.f32.gmra.mrb[0].mxu0 %v895
    %v968 = vpop.f32.mrb[0].mxu0
    %v969 = vadd.f32 0.0, %v968
    %v970 = vpop.f32.mrb[0].mxu0
    %971 = vdwg.mxu0
    %v972 = vmul.f32 %v964, %v890
    %v973 = vmul.f32 %v969, %v890
    %v974 = vtanh.pop %v972
    %v975 = vtanh.pop %v973
    %977 = vset.pattern.permute.xlu0 0
    %978 = vperm.xlu0 %977, %v974
    %v979 = vpop.permute.xlu0 %978
    %982 = vset.pattern.permute.xlu0 0
    %983 = vperm.xlu0 %982, %v975
    %v984 = vpop.permute.xlu0 %983
    %v986 = vsel %vm77, %v979, 0.0
    %v987 = vsel %vm78, %v984, 0.0
    %v988 = vsel %vm357, %v986, 0.0
    %v989 = vsel %vm357, %v987, 0.0
    %v990 = vadd.f32 %v988, %v989
    %v991 = vrot.slane %v990, 4
    %v992 = vadd.f32 %v990, %v991
    %v993 = vrot.slane %v992, 2
    %v994 = vadd.f32 %v992, %v993
    %v995 = vrot.slane %v994, 1
    %v996 = vadd.f32 %v994, %v995
    %v997 = vld [vmem:[%s3] sm:$0xff]
    %v998 = vld [vmem:[%s3 + $0x8] sm:$0xff]
    %vm999 = vcmp.gt.f32.partialorder %v997, 0.0
    %vm1000 = vcmp.gt.f32.partialorder %v998, 0.0
    %vm1001 = vcmp.gt.f32.partialorder 1.0, 0.0
    %v1002 = vsel %vm1001, 1, 0
    %vm1003 = vcmp.eq.s32.totalorder %v1002, 1
    %vm1004 = vmand %vm999, %vm1003
    %vm1005 = vmand %vm1000, %vm1003
    %v1006 = vsel %vm1004, 1.0, 0.0
    %v1007 = vsel %vm1005, 1.0, 0.0
    %v1008 = vsel %vm357, %v1006, 0.0
    %1009 = vadd.xlane.f32.xlu0 %v1008
    %v1010 = vpop.xlane.xlu0 %1009
    %v1011 = vsel %vm357, %v1007, 0.0
    %1012 = vadd.xlane.f32.xlu0 %v1011
    %v1013 = vpop.xlane.xlu0 %1012
    %v1014 = vmul.f32 %v1010, 0.7
    %v1015 = vmul.f32 %v1013, 0.7
    %v1016 = vceil.f32 %v1014
    %v1017 = vceil.f32 %v1015
    %vm1018 = vcmp.gt.f32.partialorder %v996, %v979
    %vm1019 = vcmp.gt.f32.partialorder %v996, %v984
    %vm1020 = vcmp.eq.f32.partialorder %v996, %v979
    %vm1021 = vcmp.eq.f32.partialorder %v996, %v984
    %vm1022 = vcmp.lt.s32.totalorder %v76, %v73
    %vm1023 = vcmp.lt.s32.totalorder %v76, %v74
    %vm1024 = vmand %vm1020, %vm1022
    %vm1025 = vmand %vm1021, %vm1023
    %vm1026 = vmor %vm1018, %vm1024
    %vm1027 = vmor %vm1019, %vm1025
    %vm1028 = vmand %vm1004, %vm1026
    %vm1029 = vmand %vm1005, %vm1027
    %v1030 = vsel %vm1028, 1.0, 0.0
    %v1031 = vsel %vm1029, 1.0, 0.0
    %v1032 = vsel %vm357, %v1030, 0.0
    %1033 = vadd.xlane.f32.xlu0 %v1032
    %v1034 = vpop.xlane.xlu0 %1033
    %v1035 = vsel %vm357, %v1031, 0.0
    %1036 = vadd.xlane.f32.xlu0 %v1035
    %v1037 = vpop.xlane.xlu0 %1036
    %vm1038 = vcmp.lt.f32.partialorder %v1034, %v1016
    %vm1039 = vcmp.lt.f32.partialorder %v1037, %v1017
    %vm1040 = vmand %vm1001, %vm1038
    %vm1041 = vmand %vm1001, %vm1039
    %v1042 = vsel %vm1040, 1.0, 0.0
    %v1043 = vsel %vm1041, 1.0, 0.0
    %v1044 = vsel %vm77, %v1042, 0.0
    %v1045 = vsel %vm78, %v1043, 0.0
    %v1046 = vsel %vm357, %v1044, 0.0
    %v1047 = vsel %vm357, %v1045, 0.0
    %v1048 = vadd.f32 %v1046, %v1047
    %v1049 = vrot.slane %v1048, 4
    %v1050 = vadd.f32 %v1048, %v1049
    %v1051 = vrot.slane %v1050, 2
    %v1052 = vadd.f32 %v1050, %v1051
    %v1053 = vrot.slane %v1052, 1
    %v1054 = vadd.f32 %v1052, %v1053
    %v1055 = vmul.f32 %v974, %v1042
    %v1056 = vmul.f32 %v975, %v1043
    %1058 = vset.pattern.permute.xlu0 0
    %1059 = vperm.xlu0 %1058, %v1055
    %v1060 = vpop.permute.xlu0 %1059
    %1063 = vset.pattern.permute.xlu0 0
    %1064 = vperm.xlu0 %1063, %v1056
    %v1065 = vpop.permute.xlu0 %1064
    %v1067 = vmul.f32 %v858, %v1060
    %v1068 = vmul.f32 %v859, %v1065
    %v1069 = vmul.f32 %v79, %v1042
    %v1070 = vmul.f32 %v80, %v1043
    %v1071 = vmul.f32 %v1069, %v1054
    %v1072 = vmul.f32 %v1070, %v1054
    %v1073 = vmax.f32 %v1067, 0.0
    %v1074 = vmax.f32 %v1068, 0.0
    %vm1075 = vcmp.gt.f32.partialorder %v1071, 0.0
    %vm1076 = vcmp.gt.f32.partialorder %v1072, 0.0
    %vm1077 = vmor %vm1075, %vm77
    %vm1078 = vmor %vm1076, %vm78
    %v1079 = vsel %vm1077, 0.0, -1e+30
    %v1080 = vsel %vm1078, 0.0, -1e+30
    %v1081 = vld [vmem:[%s11] sm:$0xff]
    %v1082 = vld [vmem:[%s11 + $0x8] sm:$0xff]
    %v1083 = vld [vmem:[%s11 + $0x10] sm:$0xff]
    %v1084 = vld [vmem:[%s11 + $0x18] sm:$0xff]
    %v1085 = vld [vmem:[%s11 + $0x20] sm:$0xff]
    %v1086 = vld [vmem:[%s11 + $0x28] sm:$0xff]
    %v1087 = vld [vmem:[%s12] sm:$0xff]
    %v1088 = vld [vmem:[%s12 + $0x8] sm:$0xff]
    %v1089 = vld [vmem:[%s13] sm:$0xff]
    %v1090 = vld [vmem:[%s13 + $0x8] sm:$0xff]
    %v1091 = vld [vmem:[%s14] sm:$0x1]
    %v1093 = vsel %vm188, %v1073, 0
    %v1096 = vsel %vm188, %v1074, 0
    %1098 = vmatprep.subr.mxu0 0.0
    %1099 = vmatpush1.msra.mxu0 %v1081
    %1100 = vmatprep.subr.mxu0 0.0
    %1101 = vmatpush1.msra.mxu0 %v1082
    %1102 = vmatprep.subr.mxu0 0.0
    %1103 = vmatpush1.msra.mxu0 %v1083
    %1104 = vmatprep.subr.mxu0 0.0
    %1105 = vmatpush1.msra.mxu0 %v1084
    %1106 = vmatprep.subr.mxu0 0.0
    %1107 = vmatpush1.msra.mxu0 %v1085
    %1108 = vmatprep.subr.mxu0 0.0
    %1109 = vmatpush1.msra.mxu0 %v1086
    %1110 = vmatprep.subr.mxu0 0.0
    %1111 = vmatpush1.msra.mxu0 0.0
    %1112 = vmatprep.subr.mxu0 0.0
    %1113 = vmatpush1.msra.mxu0 0.0
    %1114 = vmatprep.subr.mxu0 0.0
    %1115 = vmatpush1.msra.mxu0 0.0
    %1116 = vmatprep.subr.mxu0 0.0
    %1117 = vmatpush1.msra.mxu0 0.0
    %1118 = vmatprep.subr.mxu0 0.0
    %1119 = vmatpush1.msra.mxu0 0.0
    %1120 = vmatprep.subr.mxu0 0.0
    %1121 = vmatpush1.msra.mxu0 0.0
    %1122 = vmatprep.subr.mxu0 0.0
    %1123 = vmatpush1.msra.mxu0 0.0
    %1124 = vmatprep.subr.mxu0 0.0
    %1125 = vmatpush1.msra.mxu0 0.0
    %1126 = vmatprep.subr.mxu0 0.0
    %1127 = vmatpush1.msra.mxu0 0.0
    %1128 = vmatprep.subr.mxu0 0.0
    %1129 = vmatpush1.msra.mxu0 0.0
    %1130 = vmatprep.subr.mxu0 0.0
    %1131 = vmatpush1.msra.mxu0 0.0
    %1132 = vmatprep.subr.mxu0 0.0
    %1133 = vmatpush1.msra.mxu0 0.0
    %1134 = vmatprep.subr.mxu0 0.0
    %1135 = vmatpush1.msra.mxu0 0.0
    %1136 = vmatprep.subr.mxu0 0.0
    %1137 = vmatpush1.msra.mxu0 0.0
    %1138 = vmatprep.subr.mxu0 0.0
    %1139 = vmatpush1.msra.mxu0 0.0
    %1140 = vmatprep.subr.mxu0 0.0
    %1141 = vmatpush1.msra.mxu0 0.0
    %1142 = vmatprep.subr.mxu0 0.0
    %1143 = vmatpush1.msra.mxu0 0.0
    %1144 = vmatprep.subr.mxu0 0.0
    %1145 = vmatpush1.msra.mxu0 0.0
    %1146 = vmatprep.subr.mxu0 0.0
    %1147 = vmatpush1.msra.mxu0 0.0
    %1148 = vmatprep.subr.mxu0 0.0
    %1149 = vmatpush1.msra.mxu0 0.0
    %1150 = vmatprep.subr.mxu0 0.0
    %1151 = vmatpush1.msra.mxu0 0.0
    %1152 = vmatprep.subr.mxu0 0.0
    %1153 = vmatpush1.msra.mxu0 0.0
    %1154 = vmatprep.subr.mxu0 0.0
    %1155 = vmatpush1.msra.mxu0 0.0
    %1156 = vmatprep.subr.mxu0 0.0
    %1157 = vmatpush1.msra.mxu0 0.0
    %1158 = vmatprep.subr.mxu0 0.0
    %1159 = vmatpush1.msra.mxu0 0.0
    %1160 = vmatprep.subr.mxu0 0.0
    %1161 = vmatpush1.msra.mxu0 0.0
    %1162 = vmatprep.mubr.f32.mxu0 0.0
    %1163 = vmatmul.mubr.f32.gmra.mrb[0].mxu0 %v1093
    %v1164 = vpop.f32.mrb[0].mxu0
    %v1165 = vadd.f32 0.0, %v1164
    %v1166 = vpop.f32.mrb[0].mxu0
    %1167 = vmatprep.mubr.f32.mxu0 0.0
    %1168 = vmatmul.mubr.f32.gmra.mrb[0].mxu0 %v1096
    %v1169 = vpop.f32.mrb[0].mxu0
    %v1170 = vadd.f32 0.0, %v1169
    %v1171 = vpop.f32.mrb[0].mxu0
    %1172 = vdwg.mxu0
    %v1174 = vsel %vm357, %v1165, 0
    %v1177 = vsel %vm357, %v1170, 0
    %1179 = vmatprep.subr.mxu0 0.0
    %1180 = vmatpush1.msra.mxu0 %v1087
    %1181 = vmatprep.subr.mxu0 0.0
    %1182 = vmatpush1.msra.mxu0 %v1088
    %1183 = vmatprep.subr.mxu0 0.0
    %1184 = vmatpush1.msra.mxu0 0.0
    %1185 = vmatprep.subr.mxu0 0.0
    %1186 = vmatpush1.msra.mxu0 0.0
    %1187 = vmatprep.subr.mxu0 0.0
    %1188 = vmatpush1.msra.mxu0 0.0
    %1189 = vmatprep.subr.mxu0 0.0
    %1190 = vmatpush1.msra.mxu0 0.0
    %1191 = vmatprep.subr.mxu0 0.0
    %1192 = vmatpush1.msra.mxu0 0.0
    %1193 = vmatprep.subr.mxu0 0.0
    %1194 = vmatpush1.msra.mxu0 0.0
    %1195 = vmatprep.subr.mxu0 0.0
    %1196 = vmatpush1.msra.mxu0 0.0
    %1197 = vmatprep.subr.mxu0 0.0
    %1198 = vmatpush1.msra.mxu0 0.0
    %1199 = vmatprep.subr.mxu0 0.0
    %1200 = vmatpush1.msra.mxu0 0.0
    %1201 = vmatprep.subr.mxu0 0.0
    %1202 = vmatpush1.msra.mxu0 0.0
    %1203 = vmatprep.subr.mxu0 0.0
    %1204 = vmatpush1.msra.mxu0 0.0
    %1205 = vmatprep.subr.mxu0 0.0
    %1206 = vmatpush1.msra.mxu0 0.0
    %1207 = vmatprep.subr.mxu0 0.0
    %1208 = vmatpush1.msra.mxu0 0.0
    %1209 = vmatprep.subr.mxu0 0.0
    %1210 = vmatpush1.msra.mxu0 0.0
    %1211 = vmatprep.subr.mxu0 0.0
    %1212 = vmatpush1.msra.mxu0 0.0
    %1213 = vmatprep.subr.mxu0 0.0
    %1214 = vmatpush1.msra.mxu0 0.0
    %1215 = vmatprep.subr.mxu0 0.0
    %1216 = vmatpush1.msra.mxu0 0.0
    %1217 = vmatprep.subr.mxu0 0.0
    %1218 = vmatpush1.msra.mxu0 0.0
    %1219 = vmatprep.subr.mxu0 0.0
    %1220 = vmatpush1.msra.mxu0 0.0
    %1221 = vmatprep.subr.mxu0 0.0
    %1222 = vmatpush1.msra.mxu0 0.0
    %1223 = vmatprep.subr.mxu0 0.0
    %1224 = vmatpush1.msra.mxu0 0.0
    %1225 = vmatprep.subr.mxu0 0.0
    %1226 = vmatpush1.msra.mxu0 0.0
    %1227 = vmatprep.subr.mxu0 0.0
    %1228 = vmatpush1.msra.mxu0 0.0
    %1229 = vmatprep.subr.mxu0 0.0
    %1230 = vmatpush1.msra.mxu0 0.0
    %1231 = vmatprep.subr.mxu0 0.0
    %1232 = vmatpush1.msra.mxu0 0.0
    %1233 = vmatprep.subr.mxu0 0.0
    %1234 = vmatpush1.msra.mxu0 0.0
    %1235 = vmatprep.subr.mxu0 0.0
    %1236 = vmatpush1.msra.mxu0 0.0
    %1237 = vmatprep.subr.mxu0 0.0
    %1238 = vmatpush1.msra.mxu0 0.0
    %1239 = vmatprep.subr.mxu0 0.0
    %1240 = vmatpush1.msra.mxu0 0.0
    %1241 = vmatprep.subr.mxu0 0.0
    %1242 = vmatpush1.msra.mxu0 0.0
    %1243 = vmatprep.mubr.f32.mxu0 0.0
    %1244 = vmatmul.mubr.f32.gmra.mrb[0].mxu0 %v1174
    %v1245 = vpop.f32.mrb[0].mxu0
    %v1246 = vadd.f32 0.0, %v1245
    %v1247 = vpop.f32.mrb[0].mxu0
    %1248 = vmatprep.mubr.f32.mxu0 0.0
    %1249 = vmatmul.mubr.f32.gmra.mrb[0].mxu0 %v1177
    %v1250 = vpop.f32.mrb[0].mxu0
    %v1251 = vadd.f32 0.0, %v1250
    %v1252 = vpop.f32.mrb[0].mxu0
    %1253 = vdwg.mxu0
    %1254 = vmatprep.subr.mxu0 0.0
    %1255 = vmatpush1.msra.mxu0 %v1089
    %1256 = vmatprep.subr.mxu0 0.0
    %1257 = vmatpush1.msra.mxu0 %v1090
    %1258 = vmatprep.subr.mxu0 0.0
    %1259 = vmatpush1.msra.mxu0 0.0
    %1260 = vmatprep.subr.mxu0 0.0
    %1261 = vmatpush1.msra.mxu0 0.0
    %1262 = vmatprep.subr.mxu0 0.0
    %1263 = vmatpush1.msra.mxu0 0.0
    %1264 = vmatprep.subr.mxu0 0.0
    %1265 = vmatpush1.msra.mxu0 0.0
    %1266 = vmatprep.subr.mxu0 0.0
    %1267 = vmatpush1.msra.mxu0 0.0
    %1268 = vmatprep.subr.mxu0 0.0
    %1269 = vmatpush1.msra.mxu0 0.0
    %1270 = vmatprep.subr.mxu0 0.0
    %1271 = vmatpush1.msra.mxu0 0.0
    %1272 = vmatprep.subr.mxu0 0.0
    %1273 = vmatpush1.msra.mxu0 0.0
    %1274 = vmatprep.subr.mxu0 0.0
    %1275 = vmatpush1.msra.mxu0 0.0
    %1276 = vmatprep.subr.mxu0 0.0
    %1277 = vmatpush1.msra.mxu0 0.0
    %1278 = vmatprep.subr.mxu0 0.0
    %1279 = vmatpush1.msra.mxu0 0.0
    %1280 = vmatprep.subr.mxu0 0.0
    %1281 = vmatpush1.msra.mxu0 0.0
    %1282 = vmatprep.subr.mxu0 0.0
    %1283 = vmatpush1.msra.mxu0 0.0
    %1284 = vmatprep.subr.mxu0 0.0
    %1285 = vmatpush1.msra.mxu0 0.0
    %1286 = vmatprep.subr.mxu0 0.0
    %1287 = vmatpush1.msra.mxu0 0.0
    %1288 = vmatprep.subr.mxu0 0.0
    %1289 = vmatpush1.msra.mxu0 0.0
    %1290 = vmatprep.subr.mxu0 0.0
    %1291 = vmatpush1.msra.mxu0 0.0
    %1292 = vmatprep.subr.mxu0 0.0
    %1293 = vmatpush1.msra.mxu0 0.0
    %1294 = vmatprep.subr.mxu0 0.0
    %1295 = vmatpush1.msra.mxu0 0.0
    %1296 = vmatprep.subr.mxu0 0.0
    %1297 = vmatpush1.msra.mxu0 0.0
    %1298 = vmatprep.subr.mxu0 0.0
    %1299 = vmatpush1.msra.mxu0 0.0
    %1300 = vmatprep.subr.mxu0 0.0
    %1301 = vmatpush1.msra.mxu0 0.0
    %1302 = vmatprep.subr.mxu0 0.0
    %1303 = vmatpush1.msra.mxu0 0.0
    %1304 = vmatprep.subr.mxu0 0.0
    %1305 = vmatpush1.msra.mxu0 0.0
    %1306 = vmatprep.subr.mxu0 0.0
    %1307 = vmatpush1.msra.mxu0 0.0
    %1308 = vmatprep.subr.mxu0 0.0
    %1309 = vmatpush1.msra.mxu0 0.0
    %1310 = vmatprep.subr.mxu0 0.0
    %1311 = vmatpush1.msra.mxu0 0.0
    %1312 = vmatprep.subr.mxu0 0.0
    %1313 = vmatpush1.msra.mxu0 0.0
    %1314 = vmatprep.subr.mxu0 0.0
    %1315 = vmatpush1.msra.mxu0 0.0
    %1316 = vmatprep.subr.mxu0 0.0
    %1317 = vmatpush1.msra.mxu0 0.0
    %1318 = vmatprep.mubr.f32.mxu0 0.0
    %1319 = vmatmul.mubr.f32.gmra.mrb[0].mxu0 %v1174
    %v1320 = vpop.f32.mrb[0].mxu0
    %v1321 = vadd.f32 0.0, %v1320
    %v1322 = vpop.f32.mrb[0].mxu0
    %1323 = vmatprep.mubr.f32.mxu0 0.0
    %1324 = vmatmul.mubr.f32.gmra.mrb[0].mxu0 %v1177
    %v1325 = vpop.f32.mrb[0].mxu0
    %v1326 = vadd.f32 0.0, %v1325
    %v1327 = vpop.f32.mrb[0].mxu0
    %1328 = vdwg.mxu0
    %1330 = vset.pattern.permute.xlu0 0
    %1331 = vperm.xlu0 %1330, %v1321
    %v1332 = vpop.permute.xlu0 %1331
    %1335 = vset.pattern.permute.xlu0 0
    %1336 = vperm.xlu0 %1335, %v1326
    %v1337 = vpop.permute.xlu0 %1336
    %v1339 = vsel %vm77, %v1332, 0.0
    %v1340 = vsel %vm78, %v1337, 0.0
    %v1341 = vsel %vm357, %v1339, 0.0
    %v1342 = vsel %vm357, %v1340, 0.0
    %v1343 = vadd.f32 %v1341, %v1342
    %v1344 = vrot.slane %v1343, 4
    %v1345 = vadd.f32 %v1343, %v1344
    %v1346 = vrot.slane %v1345, 2
    %v1347 = vadd.f32 %v1345, %v1346
    %v1348 = vrot.slane %v1347, 1
    %v1349 = vadd.f32 %v1347, %v1348
    %1351 = vset.pattern.permute.xlu0 0
    %1352 = vperm.xlu0 %1351, %v1246
    %v1353 = vpop.permute.xlu0 %1352
    %1356 = vset.pattern.permute.xlu0 0
    %1357 = vperm.xlu0 %1356, %v1251
    %v1358 = vpop.permute.xlu0 %1357
    %v1360 = vadd.f32 %v1353, %v1349
    %v1361 = vadd.f32 %v1358, %v1349
    %vm1362 = vcmp.gt.f32.partialorder %v1360, 0.0
    %vm1363 = vcmp.gt.f32.partialorder %v1361, 0.0
    %v1364 = vmul.f32 %v1360, 0.2
    %v1365 = vmul.f32 %v1361, 0.2
    %v1366 = vsel %vm1362, %v1360, %v1364
    %v1367 = vsel %vm1363, %v1361, %v1365
    %v1368 = vadd.f32 %v1366, %v1079
    %v1369 = vadd.f32 %v1367, %v1080
    %v1370 = vsel %vm357, %v1368, -inf
    %1371 = vmax.xlane.f32.xlu0 %v1370
    %v1372 = vpop.xlane.xlu0 %1371
    %v1373 = vsel %vm357, %v1369, -inf
    %1374 = vmax.xlane.f32.xlu0 %v1373
    %v1375 = vpop.xlane.xlu0 %1374
    %v1376 = vsub.f32 %v1368, %v1372
    %v1377 = vsub.f32 %v1369, %v1375
    %v1378 = vmul.f32 %v1376, 1.442695
    %v1379 = vpow.pop %v1378
    %v1380 = vmul.f32 %v1377, 1.442695
    %v1381 = vpow.pop %v1380
    %v1382 = vsel %vm357, %v1379, 0.0
    %1383 = vadd.xlane.f32.xlu0 %v1382
    %v1384 = vpop.xlane.xlu0 %1383
    %v1385 = vsel %vm357, %v1381, 0.0
    %1386 = vadd.xlane.f32.xlu0 %v1385
    %v1387 = vpop.xlane.xlu0 %1386
    %v1388 = vrcp.pop %v1384
    %v1389 = vrcp.pop %v1387
    %v1390 = vmul.f32 %v1379, %v1388
    %v1391 = vmul.f32 %v1381, %v1389
    %v1393 = vlaneseq
    %v1394 = vshrl.u32 %v1393, 7
    %v1395 = vsub.s32 0, %v1394
    %v1396 = vrot.slane %v1091, %v1395
    %v1399 = vsel %vm357, %v1390, 0
    %v1402 = vsel %vm357, %v1391, 0
    %1404 = vmatprep.subr.mxu0 0.0
    %1405 = vmatpush1.msra.mxu0 %v1165
    %1406 = vmatprep.subr.mxu0 0.0
    %1407 = vmatpush1.msra.mxu0 %v1170
    %1408 = vmatprep.subr.mxu0 0.0
    %1409 = vmatpush1.msra.mxu0 0.0
    %1410 = vmatprep.subr.mxu0 0.0
    %1411 = vmatpush1.msra.mxu0 0.0
    %1412 = vmatprep.subr.mxu0 0.0
    %1413 = vmatpush1.msra.mxu0 0.0
    %1414 = vmatprep.subr.mxu0 0.0
    %1415 = vmatpush1.msra.mxu0 0.0
    %1416 = vmatprep.subr.mxu0 0.0
    %1417 = vmatpush1.msra.mxu0 0.0
    %1418 = vmatprep.subr.mxu0 0.0
    %1419 = vmatpush1.msra.mxu0 0.0
    %1420 = vmatprep.subr.mxu0 0.0
    %1421 = vmatpush1.msra.mxu0 0.0
    %1422 = vmatprep.subr.mxu0 0.0
    %1423 = vmatpush1.msra.mxu0 0.0
    %1424 = vmatprep.subr.mxu0 0.0
    %1425 = vmatpush1.msra.mxu0 0.0
    %1426 = vmatprep.subr.mxu0 0.0
    %1427 = vmatpush1.msra.mxu0 0.0
    %1428 = vmatprep.subr.mxu0 0.0
    %1429 = vmatpush1.msra.mxu0 0.0
    %1430 = vmatprep.subr.mxu0 0.0
    %1431 = vmatpush1.msra.mxu0 0.0
    %1432 = vmatprep.subr.mxu0 0.0
    %1433 = vmatpush1.msra.mxu0 0.0
    %1434 = vmatprep.subr.mxu0 0.0
    %1435 = vmatpush1.msra.mxu0 0.0
    %1436 = vmatprep.subr.mxu0 0.0
    %1437 = vmatpush1.msra.mxu0 0.0
    %1438 = vmatprep.subr.mxu0 0.0
    %1439 = vmatpush1.msra.mxu0 0.0
    %1440 = vmatprep.subr.mxu0 0.0
    %1441 = vmatpush1.msra.mxu0 0.0
    %1442 = vmatprep.subr.mxu0 0.0
    %1443 = vmatpush1.msra.mxu0 0.0
    %1444 = vmatprep.subr.mxu0 0.0
    %1445 = vmatpush1.msra.mxu0 0.0
    %1446 = vmatprep.subr.mxu0 0.0
    %1447 = vmatpush1.msra.mxu0 0.0
    %1448 = vmatprep.subr.mxu0 0.0
    %1449 = vmatpush1.msra.mxu0 0.0
    %1450 = vmatprep.subr.mxu0 0.0
    %1451 = vmatpush1.msra.mxu0 0.0
    %1452 = vmatprep.subr.mxu0 0.0
    %1453 = vmatpush1.msra.mxu0 0.0
    %1454 = vmatprep.subr.mxu0 0.0
    %1455 = vmatpush1.msra.mxu0 0.0
    %1456 = vmatprep.subr.mxu0 0.0
    %1457 = vmatpush1.msra.mxu0 0.0
    %1458 = vmatprep.subr.mxu0 0.0
    %1459 = vmatpush1.msra.mxu0 0.0
    %1460 = vmatprep.subr.mxu0 0.0
    %1461 = vmatpush1.msra.mxu0 0.0
    %1462 = vmatprep.subr.mxu0 0.0
    %1463 = vmatpush1.msra.mxu0 0.0
    %1464 = vmatprep.subr.mxu0 0.0
    %1465 = vmatpush1.msra.mxu0 0.0
    %1466 = vmatprep.subr.mxu0 0.0
    %1467 = vmatpush1.msra.mxu0 0.0
    %1468 = vmatprep.mubr.f32.mxu0 0.0
    %1469 = vmatmul.mubr.f32.gmra.mrb[0].mxu0 %v1399
    %v1470 = vpop.f32.mrb[0].mxu0
    %v1471 = vadd.f32 %v1396, %v1470
    %v1472 = vpop.f32.mrb[0].mxu0
    %1473 = vmatprep.mubr.f32.mxu0 0.0
    %1474 = vmatmul.mubr.f32.gmra.mrb[0].mxu0 %v1402
    %v1475 = vpop.f32.mrb[0].mxu0
    %v1476 = vadd.f32 %v1396, %v1475
    %v1477 = vpop.f32.mrb[0].mxu0
    %1478 = vdwg.mxu0
    %v1479 = vtanh.pop %v1471
    %v1480 = vtanh.pop %v1476
    %v1481 = vld [vmem:[%s15] sm:$0x1]
    %v1482 = vld [vmem:[%s16] sm:$0x1]
    %v1483 = vadd.f32 %v1042, %v1043
    %v1484 = vrot.slane %v1483, 4
    %v1485 = vadd.f32 %v1483, %v1484
    %v1486 = vrot.slane %v1485, 2
    %v1487 = vadd.f32 %v1485, %v1486
    %v1488 = vrot.slane %v1487, 1
    %v1489 = vadd.f32 %v1487, %v1488
    %v1490 = vmax.f32 %v1489, 1.0
    %v1491 = vrcp.pop %v1490
    %v1492 = vmul.f32 %v1479, %v1042
    %v1493 = vmul.f32 %v1480, %v1043
    %v1494 = vsel %vm357, %v1492, 0.0
    %v1495 = vsel %vm357, %v1493, 0.0
    %v1496 = vadd.f32 %v1494, %v1495
    %v1497 = vrot.slane %v1496, 4
    %v1498 = vadd.f32 %v1496, %v1497
    %v1499 = vrot.slane %v1498, 2
    %v1500 = vadd.f32 %v1498, %v1499
    %v1501 = vrot.slane %v1500, 1
    %v1502 = vadd.f32 %v1500, %v1501
    %v1503 = vmul.f32 %v1502, %v1491
    %v1504 = vsub.f32 %v1479, %v1503
    %v1505 = vsub.f32 %v1480, %v1503
    %v1506 = vmul.f32 %v1504, %v1042
    %v1507 = vmul.f32 %v1505, %v1043
    %v1508 = vmul.f32 %v1506, %v1506
    %v1509 = vmul.f32 %v1507, %v1507
    %v1510 = vsel %vm357, %v1508, 0.0
    %v1511 = vsel %vm357, %v1509, 0.0
    %v1512 = vadd.f32 %v1510, %v1511
    %v1513 = vrot.slane %v1512, 4
    %v1514 = vadd.f32 %v1512, %v1513
    %v1515 = vrot.slane %v1514, 2
    %v1516 = vadd.f32 %v1514, %v1515
    %v1517 = vrot.slane %v1516, 1
    %v1518 = vadd.f32 %v1516, %v1517
    %v1519 = vmul.f32 %v1518, %v1491
    %v1521 = vlaneseq
    %v1522 = vshrl.u32 %v1521, 7
    %v1523 = vsub.s32 0, %v1522
    %v1524 = vrot.slane %v1481, %v1523
    %v1526 = vmul.f32 %v1524, %v1504
    %v1527 = vmul.f32 %v1524, %v1505
    %v1528 = vadd.f32 %v1519, 1e-05
    %v1529 = vrsqrt.pop %v1528
    %v1530 = vmul.f32 %v1526, %v1529
    %v1531 = vmul.f32 %v1527, %v1529
    %v1533 = vlaneseq
    %v1534 = vshrl.u32 %v1533, 7
    %v1535 = vsub.s32 0, %v1534
    %v1536 = vrot.slane %v1482, %v1535
    %v1538 = vadd.f32 %v1530, %v1536
    %v1539 = vadd.f32 %v1531, %v1536
    %v1540 = vld [vmem:[%s17] sm:$0xff]
    %v1541 = vld [vmem:[%s17 + $0x8] sm:$0xff]
    %v1542 = vmul.f32 %v1540, %v1540
    %v1543 = vmul.f32 %v1541, %v1541
    %v1544 = vsel %vm872, %v1542, 0.0
    %v1545 = vsel %vm872, %v1543, 0.0
    %v1546 = vadd.f32 %v1544, %v1545
    %v1547 = vrot.slane %v1546, 4
    %v1548 = vadd.f32 %v1546, %v1547
    %v1549 = vrot.slane %v1548, 2
    %v1550 = vadd.f32 %v1548, %v1549
    %v1551 = vrot.slane %v1550, 1
    %v1552 = vadd.f32 %v1550, %v1551
    %v1553 = vrsqrt.pop %v1552
    %v1555 = vsel %vm357, %v1538, 0
    %v1558 = vsel %vm357, %v1539, 0
    %1560 = vmatprep.subr.mxu0 0.0
    %1561 = vmatpush1.msra.mxu0 %v1540
    %1562 = vmatprep.subr.mxu0 0.0
    %1563 = vmatpush1.msra.mxu0 %v1541
    %1564 = vmatprep.subr.mxu0 0.0
    %1565 = vmatpush1.msra.mxu0 0.0
    %1566 = vmatprep.subr.mxu0 0.0
    %1567 = vmatpush1.msra.mxu0 0.0
    %1568 = vmatprep.subr.mxu0 0.0
    %1569 = vmatpush1.msra.mxu0 0.0
    %1570 = vmatprep.subr.mxu0 0.0
    %1571 = vmatpush1.msra.mxu0 0.0
    %1572 = vmatprep.subr.mxu0 0.0
    %1573 = vmatpush1.msra.mxu0 0.0
    %1574 = vmatprep.subr.mxu0 0.0
    %1575 = vmatpush1.msra.mxu0 0.0
    %1576 = vmatprep.subr.mxu0 0.0
    %1577 = vmatpush1.msra.mxu0 0.0
    %1578 = vmatprep.subr.mxu0 0.0
    %1579 = vmatpush1.msra.mxu0 0.0
    %1580 = vmatprep.subr.mxu0 0.0
    %1581 = vmatpush1.msra.mxu0 0.0
    %1582 = vmatprep.subr.mxu0 0.0
    %1583 = vmatpush1.msra.mxu0 0.0
    %1584 = vmatprep.subr.mxu0 0.0
    %1585 = vmatpush1.msra.mxu0 0.0
    %1586 = vmatprep.subr.mxu0 0.0
    %1587 = vmatpush1.msra.mxu0 0.0
    %1588 = vmatprep.subr.mxu0 0.0
    %1589 = vmatpush1.msra.mxu0 0.0
    %1590 = vmatprep.subr.mxu0 0.0
    %1591 = vmatpush1.msra.mxu0 0.0
    %1592 = vmatprep.subr.mxu0 0.0
    %1593 = vmatpush1.msra.mxu0 0.0
    %1594 = vmatprep.subr.mxu0 0.0
    %1595 = vmatpush1.msra.mxu0 0.0
    %1596 = vmatprep.subr.mxu0 0.0
    %1597 = vmatpush1.msra.mxu0 0.0
    %1598 = vmatprep.subr.mxu0 0.0
    %1599 = vmatpush1.msra.mxu0 0.0
    %1600 = vmatprep.subr.mxu0 0.0
    %1601 = vmatpush1.msra.mxu0 0.0
    %1602 = vmatprep.subr.mxu0 0.0
    %1603 = vmatpush1.msra.mxu0 0.0
    %1604 = vmatprep.subr.mxu0 0.0
    %1605 = vmatpush1.msra.mxu0 0.0
    %1606 = vmatprep.subr.mxu0 0.0
    %1607 = vmatpush1.msra.mxu0 0.0
    %1608 = vmatprep.subr.mxu0 0.0
    %1609 = vmatpush1.msra.mxu0 0.0
    %1610 = vmatprep.subr.mxu0 0.0
    %1611 = vmatpush1.msra.mxu0 0.0
    %1612 = vmatprep.subr.mxu0 0.0
    %1613 = vmatpush1.msra.mxu0 0.0
    %1614 = vmatprep.subr.mxu0 0.0
    %1615 = vmatpush1.msra.mxu0 0.0
    %1616 = vmatprep.subr.mxu0 0.0
    %1617 = vmatpush1.msra.mxu0 0.0
    %1618 = vmatprep.subr.mxu0 0.0
    %1619 = vmatpush1.msra.mxu0 0.0
    %1620 = vmatprep.subr.mxu0 0.0
    %1621 = vmatpush1.msra.mxu0 0.0
    %1622 = vmatprep.subr.mxu0 0.0
    %1623 = vmatpush1.msra.mxu0 0.0
    %1624 = vmatprep.mubr.f32.mxu0 0.0
    %1625 = vmatmul.mubr.f32.gmra.mrb[0].mxu0 %v1555
    %v1626 = vpop.f32.mrb[0].mxu0
    %v1627 = vadd.f32 0.0, %v1626
    %v1628 = vpop.f32.mrb[0].mxu0
    %1629 = vmatprep.mubr.f32.mxu0 0.0
    %1630 = vmatmul.mubr.f32.gmra.mrb[0].mxu0 %v1558
    %v1631 = vpop.f32.mrb[0].mxu0
    %v1632 = vadd.f32 0.0, %v1631
    %v1633 = vpop.f32.mrb[0].mxu0
    %1634 = vdwg.mxu0
    %v1635 = vmul.f32 %v1627, %v1553
    %v1636 = vmul.f32 %v1632, %v1553
    %v1637 = vtanh.pop %v1635
    %v1638 = vtanh.pop %v1636
    %1640 = vset.pattern.permute.xlu0 0
    %1641 = vperm.xlu0 %1640, %v1637
    %v1642 = vpop.permute.xlu0 %1641
    %1645 = vset.pattern.permute.xlu0 0
    %1646 = vperm.xlu0 %1645, %v1638
    %v1647 = vpop.permute.xlu0 %1646
    %v1649 = vsel %vm77, %v1642, 0.0
    %v1650 = vsel %vm78, %v1647, 0.0
    %v1651 = vsel %vm357, %v1649, 0.0
    %v1652 = vsel %vm357, %v1650, 0.0
    %v1653 = vadd.f32 %v1651, %v1652
    %v1654 = vrot.slane %v1653, 4
    %v1655 = vadd.f32 %v1653, %v1654
    %v1656 = vrot.slane %v1655, 2
    %v1657 = vadd.f32 %v1655, %v1656
    %v1658 = vrot.slane %v1657, 1
    %v1659 = vadd.f32 %v1657, %v1658
    %vm1660 = vcmp.gt.f32.partialorder %v1054, 0.0
    %v1661 = vsel %vm1660, 1, 0
    %vm1662 = vcmp.eq.s32.totalorder %v1661, 1
    %vm1663 = vmand %vm999, %vm1662
    %vm1664 = vmand %vm1000, %vm1662
    %v1665 = vsel %vm1663, 1.0, 0.0
    %v1666 = vsel %vm1664, 1.0, 0.0
    %v1667 = vsel %vm357, %v1665, 0.0
    %1668 = vadd.xlane.f32.xlu0 %v1667
    %v1669 = vpop.xlane.xlu0 %1668
    %v1670 = vsel %vm357, %v1666, 0.0
    %1671 = vadd.xlane.f32.xlu0 %v1670
    %v1672 = vpop.xlane.xlu0 %1671
    %v1673 = vmul.f32 %v1669, 0.5
    %v1674 = vmul.f32 %v1672, 0.5
    %v1675 = vceil.f32 %v1673
    %v1676 = vceil.f32 %v1674
    %vm1677 = vcmp.gt.f32.partialorder %v1042, 0.0
    %vm1678 = vcmp.gt.f32.partialorder %v1043, 0.0
    %v1679 = vsel %vm1677, 1, 0
    %v1680 = vsel %vm1678, 1, 0
    %vm1681 = vcmp.eq.s32.totalorder %v1679, 1
    %vm1682 = vcmp.eq.s32.totalorder %v1680, 1
    %vm1683 = vmand %vm999, %vm1681
    %vm1684 = vmand %vm1000, %vm1682
    %vm1685 = vmand %vm1683, %vm1662
    %vm1686 = vmand %vm1684, %vm1662
    %vm1687 = vcmp.gt.f32.partialorder %v1659, %v1642
    %vm1688 = vcmp.gt.f32.partialorder %v1659, %v1647
    %vm1689 = vcmp.eq.f32.partialorder %v1659, %v1642
    %vm1690 = vcmp.eq.f32.partialorder %v1659, %v1647
    %vm1691 = vmand %vm1689, %vm1022
    %vm1692 = vmand %vm1690, %vm1023
    %vm1693 = vmor %vm1687, %vm1691
    %vm1694 = vmor %vm1688, %vm1692
    %vm1695 = vmand %vm1685, %vm1693
    %vm1696 = vmand %vm1686, %vm1694
    %v1697 = vsel %vm1695, 1.0, 0.0
    %v1698 = vsel %vm1696, 1.0, 0.0
    %v1699 = vsel %vm357, %v1697, 0.0
    %1700 = vadd.xlane.f32.xlu0 %v1699
    %v1701 = vpop.xlane.xlu0 %1700
    %v1702 = vsel %vm357, %v1698, 0.0
    %1703 = vadd.xlane.f32.xlu0 %v1702
    %v1704 = vpop.xlane.xlu0 %1703
    %vm1705 = vcmp.lt.f32.partialorder %v1701, %v1675
    %vm1706 = vcmp.lt.f32.partialorder %v1704, %v1676
    %vm1707 = vmand %vm1677, %vm1705
    %vm1708 = vmand %vm1678, %vm1706
    %v1709 = vsel %vm1707, 1.0, 0.0
    %v1710 = vsel %vm1708, 1.0, 0.0
    %v1711 = vmul.f32 %v1637, %v1709
    %v1712 = vmul.f32 %v1638, %v1710
    %1714 = vset.pattern.permute.xlu0 0
    %1715 = vperm.xlu0 %1714, %v1711
    %v1716 = vpop.permute.xlu0 %1715
    %1719 = vset.pattern.permute.xlu0 0
    %1720 = vperm.xlu0 %1719, %v1712
    %v1721 = vpop.permute.xlu0 %1720
    %v1723 = vmul.f32 %v1538, %v1716
    %v1724 = vmul.f32 %v1539, %v1721
    %v1725 = vld [vmem:[%s2] sm:$0xff]
    %v1726 = vld [vmem:[%s2 + $0x8] sm:$0xff]
    %v1727 = vmul.f32 %v1725, %v1709
    %v1728 = vmul.f32 %v1726, %v1710
    %vm1729 = vcmp.gt.f32.partialorder %v1727, 0.0
    %vm1730 = vcmp.gt.f32.partialorder %v1728, 0.0
    %v1731 = vsel %vm1729, 1, 0
    %v1732 = vsel %vm1730, 1, 0
    %1733 = vset.pattern.permute.xlu0 0
    %1734 = vperm.xlu0 %1733, %v1731
    %v1735 = vpop.permute.xlu0 %1734
    %1736 = vset.pattern.permute.xlu0 0
    %1737 = vperm.xlu0 %1736, %v1732
    %v1738 = vpop.permute.xlu0 %1737
    %vm1739 = vcmp.eq.s32.totalorder %v1735, 1
    %vm1740 = vcmp.eq.s32.totalorder %v1738, 1
    %v1741 = vsel %vm1739, %v1723, -1e+30
    %v1742 = vsel %vm1740, %v1724, -1e+30
    %v1743 = vsel %vm357, %v1741, -inf
    %v1744 = vsel %vm357, %v1742, -inf
    %v1745 = vmax.f32 %v1743, %v1744
    %v1746 = vrot.slane %v1745, 4
    %v1747 = vmax.f32 %v1745, %v1746
    %v1748 = vrot.slane %v1747, 2
    %v1749 = vmax.f32 %v1747, %v1748
    %v1750 = vrot.slane %v1749, 1
    %v1751 = vmax.f32 %v1749, %v1750
    %1752 = vset.pattern.permute.xlu0 1
    %1753 = vperm.xlu0 %1752, %v1731
    %v1754 = vpop.permute.xlu0 %1753
    %1755 = vset.pattern.permute.xlu0 1
    %1756 = vperm.xlu0 %1755, %v1732
    %v1757 = vpop.permute.xlu0 %1756
    %vm1758 = vcmp.eq.s32.totalorder %v1754, 1
    %vm1759 = vcmp.eq.s32.totalorder %v1757, 1
    %v1760 = vsel %vm1758, %v1723, -1e+30
    %v1761 = vsel %vm1759, %v1724, -1e+30
    %v1762 = vsel %vm357, %v1760, -inf
    %v1763 = vsel %vm357, %v1761, -inf
    %v1764 = vmax.f32 %v1762, %v1763
    %v1765 = vrot.slane %v1764, 4
    %v1766 = vmax.f32 %v1764, %v1765
    %v1767 = vrot.slane %v1766, 2
    %v1768 = vmax.f32 %v1766, %v1767
    %v1769 = vrot.slane %v1768, 1
    %v1770 = vmax.f32 %v1768, %v1769
    %vm1771 = vcmask 1040384
    %v1772 = vsel %vm1771, %v1751, %v1770
    %v1773 = vmax.f32 %v1772, 0.0
    %v1774 = vld [vmem:[%s18] sm:$0xff]
    %v1775 = vld [vmem:[%s18 + $0x8] sm:$0xff]
    %v1776 = vld [vmem:[%s19] sm:$0x1]
    %v1778 = vlaneseq
    %v1779 = vshrl.u32 %v1778, 7
    %v1780 = vsub.s32 0, %v1779
    %v1781 = vrot.slane %v1776, %v1780
    %v1784 = vsel %vm357, %v1773, 0
    %1786 = vmatprep.subr.mxu0 0.0
    %1787 = vmatpush1.msra.mxu0 %v1774
    %1788 = vmatprep.subr.mxu0 0.0
    %1789 = vmatpush1.msra.mxu0 %v1775
    %1790 = vmatprep.subr.mxu0 0.0
    %1791 = vmatpush1.msra.mxu0 0.0
    %1792 = vmatprep.subr.mxu0 0.0
    %1793 = vmatpush1.msra.mxu0 0.0
    %1794 = vmatprep.subr.mxu0 0.0
    %1795 = vmatpush1.msra.mxu0 0.0
    %1796 = vmatprep.subr.mxu0 0.0
    %1797 = vmatpush1.msra.mxu0 0.0
    %1798 = vmatprep.subr.mxu0 0.0
    %1799 = vmatpush1.msra.mxu0 0.0
    %1800 = vmatprep.subr.mxu0 0.0
    %1801 = vmatpush1.msra.mxu0 0.0
    %1802 = vmatprep.subr.mxu0 0.0
    %1803 = vmatpush1.msra.mxu0 0.0
    %1804 = vmatprep.subr.mxu0 0.0
    %1805 = vmatpush1.msra.mxu0 0.0
    %1806 = vmatprep.subr.mxu0 0.0
    %1807 = vmatpush1.msra.mxu0 0.0
    %1808 = vmatprep.subr.mxu0 0.0
    %1809 = vmatpush1.msra.mxu0 0.0
    %1810 = vmatprep.subr.mxu0 0.0
    %1811 = vmatpush1.msra.mxu0 0.0
    %1812 = vmatprep.subr.mxu0 0.0
    %1813 = vmatpush1.msra.mxu0 0.0
    %1814 = vmatprep.subr.mxu0 0.0
    %1815 = vmatpush1.msra.mxu0 0.0
    %1816 = vmatprep.subr.mxu0 0.0
    %1817 = vmatpush1.msra.mxu0 0.0
    %1818 = vmatprep.subr.mxu0 0.0
    %1819 = vmatpush1.msra.mxu0 0.0
    %1820 = vmatprep.subr.mxu0 0.0
    %1821 = vmatpush1.msra.mxu0 0.0
    %1822 = vmatprep.subr.mxu0 0.0
    %1823 = vmatpush1.msra.mxu0 0.0
    %1824 = vmatprep.subr.mxu0 0.0
    %1825 = vmatpush1.msra.mxu0 0.0
    %1826 = vmatprep.subr.mxu0 0.0
    %1827 = vmatpush1.msra.mxu0 0.0
    %1828 = vmatprep.subr.mxu0 0.0
    %1829 = vmatpush1.msra.mxu0 0.0
    %1830 = vmatprep.subr.mxu0 0.0
    %1831 = vmatpush1.msra.mxu0 0.0
    %1832 = vmatprep.subr.mxu0 0.0
    %1833 = vmatpush1.msra.mxu0 0.0
    %1834 = vmatprep.subr.mxu0 0.0
    %1835 = vmatpush1.msra.mxu0 0.0
    %1836 = vmatprep.subr.mxu0 0.0
    %1837 = vmatpush1.msra.mxu0 0.0
    %1838 = vmatprep.subr.mxu0 0.0
    %1839 = vmatpush1.msra.mxu0 0.0
    %1840 = vmatprep.subr.mxu0 0.0
    %1841 = vmatpush1.msra.mxu0 0.0
    %1842 = vmatprep.subr.mxu0 0.0
    %1843 = vmatpush1.msra.mxu0 0.0
    %1844 = vmatprep.subr.mxu0 0.0
    %1845 = vmatpush1.msra.mxu0 0.0
    %1846 = vmatprep.subr.mxu0 0.0
    %1847 = vmatpush1.msra.mxu0 0.0
    %1848 = vmatprep.subr.mxu0 0.0
    %1849 = vmatpush1.msra.mxu0 0.0
    %1850 = vmatprep.mubr.f32.mxu0 0.0
    %1851 = vmatmul.mubr.f32.gmra.mrb[0].mxu0 %v1784
    %v1852 = vpop.f32.mrb[0].mxu0
    %v1853 = vadd.f32 %v1781, %v1852
    %v1854 = vpop.f32.mrb[0].mxu0
    %1855 = vdwg.mxu0
    %v1856 = vmax.f32 %v1853, 0.0
    %v1857 = vld [vmem:[%s20] sm:$0xff]
    %v1858 = vld [vmem:[%s20 + $0x8] sm:$0xff]
    %v1859 = vld [vmem:[%s21] sm:$0x1]
    %v1861 = vlaneseq
    %v1862 = vshrl.u32 %v1861, 7
    %v1863 = vsub.s32 0, %v1862
    %v1864 = vrot.slane %v1859, %v1863
    %v1867 = vsel %vm357, %v1856, 0
    %1869 = vmatprep.subr.mxu0 0.0
    %1870 = vmatpush1.msra.mxu0 %v1857
    %1871 = vmatprep.subr.mxu0 0.0
    %1872 = vmatpush1.msra.mxu0 %v1858
    %1873 = vmatprep.subr.mxu0 0.0
    %1874 = vmatpush1.msra.mxu0 0.0
    %1875 = vmatprep.subr.mxu0 0.0
    %1876 = vmatpush1.msra.mxu0 0.0
    %1877 = vmatprep.subr.mxu0 0.0
    %1878 = vmatpush1.msra.mxu0 0.0
    %1879 = vmatprep.subr.mxu0 0.0
    %1880 = vmatpush1.msra.mxu0 0.0
    %1881 = vmatprep.subr.mxu0 0.0
    %1882 = vmatpush1.msra.mxu0 0.0
    %1883 = vmatprep.subr.mxu0 0.0
    %1884 = vmatpush1.msra.mxu0 0.0
    %1885 = vmatprep.subr.mxu0 0.0
    %1886 = vmatpush1.msra.mxu0 0.0
    %1887 = vmatprep.subr.mxu0 0.0
    %1888 = vmatpush1.msra.mxu0 0.0
    %1889 = vmatprep.subr.mxu0 0.0
    %1890 = vmatpush1.msra.mxu0 0.0
    %1891 = vmatprep.subr.mxu0 0.0
    %1892 = vmatpush1.msra.mxu0 0.0
    %1893 = vmatprep.subr.mxu0 0.0
    %1894 = vmatpush1.msra.mxu0 0.0
    %1895 = vmatprep.subr.mxu0 0.0
    %1896 = vmatpush1.msra.mxu0 0.0
    %1897 = vmatprep.subr.mxu0 0.0
    %1898 = vmatpush1.msra.mxu0 0.0
    %1899 = vmatprep.subr.mxu0 0.0
    %1900 = vmatpush1.msra.mxu0 0.0
    %1901 = vmatprep.subr.mxu0 0.0
    %1902 = vmatpush1.msra.mxu0 0.0
    %1903 = vmatprep.subr.mxu0 0.0
    %1904 = vmatpush1.msra.mxu0 0.0
    %1905 = vmatprep.subr.mxu0 0.0
    %1906 = vmatpush1.msra.mxu0 0.0
    %1907 = vmatprep.subr.mxu0 0.0
    %1908 = vmatpush1.msra.mxu0 0.0
    %1909 = vmatprep.subr.mxu0 0.0
    %1910 = vmatpush1.msra.mxu0 0.0
    %1911 = vmatprep.subr.mxu0 0.0
    %1912 = vmatpush1.msra.mxu0 0.0
    %1913 = vmatprep.subr.mxu0 0.0
    %1914 = vmatpush1.msra.mxu0 0.0
    %1915 = vmatprep.subr.mxu0 0.0
    %1916 = vmatpush1.msra.mxu0 0.0
    %1917 = vmatprep.subr.mxu0 0.0
    %1918 = vmatpush1.msra.mxu0 0.0
    %1919 = vmatprep.subr.mxu0 0.0
    %1920 = vmatpush1.msra.mxu0 0.0
    %1921 = vmatprep.subr.mxu0 0.0
    %1922 = vmatpush1.msra.mxu0 0.0
    %1923 = vmatprep.subr.mxu0 0.0
    %1924 = vmatpush1.msra.mxu0 0.0
    %1925 = vmatprep.subr.mxu0 0.0
    %1926 = vmatpush1.msra.mxu0 0.0
    %1927 = vmatprep.subr.mxu0 0.0
    %1928 = vmatpush1.msra.mxu0 0.0
    %1929 = vmatprep.subr.mxu0 0.0
    %1930 = vmatpush1.msra.mxu0 0.0
    %1931 = vmatprep.subr.mxu0 0.0
    %1932 = vmatpush1.msra.mxu0 0.0
    %1933 = vmatprep.mubr.f32.mxu0 0.0
    %1934 = vmatmul.mubr.f32.gmra.mrb[0].mxu0 %v1867
    %v1935 = vpop.f32.mrb[0].mxu0
    %v1936 = vadd.f32 %v1864, %v1935
    %v1937 = vpop.f32.mrb[0].mxu0
    %1938 = vdwg.mxu0
    %vm1939 = vcmask 254976
    %1940 = vst.msk [vmem:[#allocation2] sm:$0x3] %vm1939, %v1936
    // Predicated region
    $region90: #{statement_encoder_forward.1} parent=1 // pred_check
      _
    $region91: #{statement_encoder_forward.1} parent=1 // pred_check_branch
      %1942 = sbr.rel (0) target = $region93
    $region92: #{statement_encoder_forward.1} parent=1 // pred_region
      %s1944 = ssub.s32 32, 32
      %1945 = vsyncadd [#allocation3], %s1944
      %s1947 = sshll.u32 [#allocation2], 4
      %s1948 = int_to_ptr.vmem [resolvable:$true] %s1947
      %1950 = dma.vmem_to_hbm [thread:$0]  %s1948, 32, %s22, [#allocation3]
    $region93: #{statement_encoder_forward.1} parent=1 // pred_fallthru
      _
    // Predicated region
    $region94: #{statement_encoder_forward.1} parent=1 // pred_check
      _
    $region95: #{statement_encoder_forward.1} parent=1 // pred_check_branch
      %1952 = sbr.rel (0) target = $region97
    $region96: #{statement_encoder_forward.1} parent=1 // pred_region
      %1953 = dma.done [#allocation3], 32
    $region97: #{statement_encoder_forward.1} parent=1 // pred_fallthru
      _
    %1954 = vsyncpa [#allocation3], 1

</llo_original>
